<compile_context>
chip_gen: v7x
topology: tpu7x:2x2x1
jax: 0.10.0
libtpu: 0.0.40
codegen_flags: <defaults>
</compile_context>

<pallas_src>
import functools

import jax
import jax.numpy as jnp
from jax import lax
from jax.experimental import pallas as pl
from jax.experimental.pallas import tpu as pltpu

_B_TILE = 8  # images per grid step (>= 8 so the 2-D output block is sublane-aligned)


def _round_up(x, m):
    return (x + m - 1) // m * m


# ---------------------------------------------------------------------------
# Fused Pallas kernel — one grid step = one batch tile of _B_TILE images.
#   conv (channel-major MXU matmul) + bias + ReLU  ->  FC (per-channel MXU GEMM)
# ---------------------------------------------------------------------------
def _graft_fused_kernel(p_ref, wm_ref, cb_ref, w4_ref, fb_ref, o_ref, conv_scr):
    # p_ref   : (B_tile, K_pad, HW)    bf16  im2col patches (K channel-major)
    # wm_ref  : (Cout, K_pad)          bf16  conv weight (OIHW rows), K zero-padded
    # cb_ref  : (Cout, 1)              f32   conv bias
    # w4_ref  : (Cout, HW, Fout_pad)   bf16  FC weight, torch view(B,-1) order baked in
    # fb_ref  : (1, Fout_pad)          f32   FC bias, zero-padded
    # o_ref   : (B_tile, Fout_pad)     f32   lane-dense 2-D output block
    # conv_scr: (B_tile, Cout, HW)     bf16  VMEM scratch holding ReLU(conv) features
    b_tile, _, hw = p_ref.shape
    cout = wm_ref.shape[0]

    wm = wm_ref[...]                                       # VMEM-resident weights
    cb = jnp.broadcast_to(cb_ref[...], (cout, hw))         # hoist broadcast out of loop

    # --- Phase 1: truncate_net (Conv2d + ReLU), channel-major, one MXU dot per
    # image. fori_loop keeps live ranges bounded; each (Cout, HW) tile goes
    # straight to VMEM scratch with a clean leading-dim store.
    def conv_body(b, carry):
        conv_b = jnp.dot(wm, p_ref[b], preferred_element_type=jnp.float32)  # (Cout, HW)
        conv_b = jnp.maximum(conv_b + cb, 0.0)
        conv_scr[b] = conv_b.astype(conv_scr.dtype)
        return carry

    lax.fori_loop(0, b_tile, conv_body, 0)

    # --- Phase 2: fc — contract over HW on the MXU per channel with M = B_tile
    # (a GEMM, not a GEMV). Accumulator is a single (B_tile, Fout_pad) f32 vreg.
    conv = conv_scr[...]                                   # (B_tile, Cout, HW), ~8 vregs
    acc = jnp.zeros(o_ref.shape, jnp.float32)
    for co in range(cout):                                 # Cout is small and static
        acc = acc + jnp.dot(conv[:, co, :], w4_ref[co],
                            preferred_element_type=jnp.float32)
    o_ref[...] = acc + fb_ref[...]


# ---------------------------------------------------------------------------
# One-time weight preparation (hoisted out of the per-forward path).
# ---------------------------------------------------------------------------
def prepare_graft_params(conv_w, conv_b, fc_w, fc_b, img_hw):
    H, W = img_hw
    Cout, Cin, KH, KW = conv_w.shape
    Fout, Fin = fc_w.shape
    assert Fin == Cout * H * W, (Fin, Cout, H, W)
    K = Cin * KH * KW
    K_pad = _round_up(K, 32)
    Fout_pad = _round_up(Fout, 128)

    # Conv weight as (Cout, K_pad): channel-major conv output, no host-side .T.
    wm = conv_w.reshape(Cout, K)                                    # torch OIHW order
    wm = jnp.pad(wm, ((0, 0), (0, K_pad - K))).astype(jnp.bfloat16)
    cb = conv_b.reshape(Cout, 1).astype(jnp.float32)

    # torch's x.view(B, -1) on NCHW flattens features as co*H*W + (h*W + w);
    # bake that permutation into the FC weight once:
    # (Fout, Cout*HW) -> (Cout, HW, Fout_pad), zero-padded along Fout (lane-dense).
    w4 = jnp.transpose(fc_w.reshape(Fout, Cout, H * W), (1, 2, 0))  # (Cout, HW, Fout)
    w4 = jnp.pad(w4, ((0, 0), (0, 0), (0, Fout_pad - Fout))).astype(jnp.bfloat16)
    fb = jnp.pad(fc_b, (0, Fout_pad - Fout)).reshape(1, Fout_pad).astype(jnp.float32)
    return {"wm": wm, "cb": cb, "w4": w4, "fb": fb}


# ---------------------------------------------------------------------------
# Forward pass.
# ---------------------------------------------------------------------------
@functools.partial(jax.jit, static_argnames=("kh", "kw", "fc_out"))
def graft_layer_forward(x, wm, cb, w4, fb, *, kh, kw, fc_out):
    B, Cin, H, W = x.shape
    Cout, K_pad = wm.shape
    _, HW, Fout_pad = w4.shape
    assert HW == H * W
    K = Cin * kh * kw
    ph, pw = (kh - 1) // 2, (kw - 1) // 2

    # im2col in bf16, kept channel-major (B, K_pad, HW): no host-side transpose
    # of the ~10x inflated patch tensor.
    # TODO(synk): for large images, move patch extraction in-kernel (halo'd x
    # tile in VMEM + 9 shifted accumulating dots) to avoid the inflated HBM copy.
    x_pad = jnp.pad(x, ((0, 0), (0, 0), (ph, ph), (pw, pw)))
    slabs = [x_pad[:, :, dy:dy + H, dx:dx + W]
             for dy in range(kh) for dx in range(kw)]               # each (B,Cin,H,W)
    patches = jnp.stack(slabs, axis=2).reshape(B, K, H * W)         # k = ci*kh*kw + dy*kw + dx
    B_pad = _round_up(B, _B_TILE)
    patches = jnp.pad(patches,
                      ((0, B_pad - B), (0, K_pad - K), (0, 0))).astype(jnp.bfloat16)

    out = pl.pallas_call(
        _graft_fused_kernel,
        out_shape=jax.ShapeDtypeStruct((B_pad, Fout_pad), jnp.float32),
        grid=(B_pad // _B_TILE,),
        in_specs=[
            pl.BlockSpec((_B_TILE, K_pad, HW), lambda t: (t, 0, 0)),   # per-tile patches
            pl.BlockSpec((Cout, K_pad), lambda t: (0, 0)),             # conv weight (resident)
            pl.BlockSpec((Cout, 1), lambda t: (0, 0)),                 # conv bias
            pl.BlockSpec((Cout, HW, Fout_pad), lambda t: (0, 0, 0)),   # fc weight (resident)
            pl.BlockSpec((1, Fout_pad), lambda t: (0, 0)),             # fc bias
        ],
        out_specs=pl.BlockSpec((_B_TILE, Fout_pad), lambda t: (t, 0)),
        scratch_shapes=[pltpu.VMEM((_B_TILE, Cout, HW), jnp.bfloat16)],
        compiler_params=pltpu.CompilerParams(
            dimension_semantics=("parallel",)),   # v7x: batch tiles across both TCs
    )(patches, wm, cb, w4, fb)

    return out[:B, :fc_out]


# ---------------------------------------------------------------------------
# Demo / smoke test
# ---------------------------------------------------------------------------
if __name__ == "__main__":
    # B=10 -> padded to 16 -> grid=(2,): exercises batch padding and keeps two
    # parallel grid steps (both v7x TensorCores busy).
    B, Cin, H, W = 10, 3, 16, 16
    Cout, Fout = 8, 10
    Fin = Cout * H * W

    key = jax.random.PRNGKey(0)
    k_x, k_cw, k_cb, k_fw, k_fb = jax.random.split(key, 5)

    x = jax.random.normal(k_x, (B, Cin, H, W), dtype=jnp.float32)
    # Synthetic parameters with nn.Conv2d / nn.Linear layouts.
    conv_w = jax.random.normal(k_cw, (Cout, Cin, 3, 3), dtype=jnp.float32) * 0.1
    conv_b = jax.random.normal(k_cb, (Cout,), dtype=jnp.float32) * 0.1
    fc_w = jax.random.normal(k_fw, (Fout, Fin), dtype=jnp.float32) * 0.02
    fc_b = jax.random.normal(k_fb, (Fout,), dtype=jnp.float32) * 0.02

    params = prepare_graft_params(conv_w, conv_b, fc_w, fc_b, (H, W))
    out = graft_layer_forward(x, params["wm"], params["cb"], params["w4"],
                              params["fb"], kh=3, kw=3, fc_out=Fout)
    out = jax.block_until_ready(out)
    assert out.shape == (B, Fout), out.shape

    # f32 reference of the same math (kernel streams are bf16 -> loose tol).
    ref_feat = lax.conv_general_dilated(
        x, conv_w, window_strides=(1, 1), padding="SAME",
        dimension_numbers=("NCHW", "OIHW", "NCHW"))
    ref_feat = jnp.maximum(ref_feat + conv_b[None, :, None, None], 0.0)
    ref = ref_feat.reshape(B, -1) @ fc_w.T + fc_b
    err = float(jnp.max(jnp.abs(out - ref)))
    assert err < 5e-2, err

    print("KERNEL_OK")
</pallas_src>

<mosaic_0001>
module attributes {stable_mosaic.version = 11 : i64} {
  func.func @_graft_fused_kernel(%arg0: i32, %arg1: memref<8x32x256xbf16, #tpu.memory_space<vmem>>, %arg2: memref<8x32xbf16, #tpu.memory_space<vmem>>, %arg3: memref<8x1xf32, #tpu.memory_space<vmem>>, %arg4: memref<8x256x128xbf16, #tpu.memory_space<vmem>>, %arg5: memref<1x128xf32, #tpu.memory_space<vmem>>, %arg6: memref<8x128xf32, #tpu.memory_space<vmem>>, %arg7: memref<8x8x256xbf16, #tpu.memory_space<vmem>>) attributes {dimension_semantics = [#tpu.dimension_semantics<parallel>], iteration_bounds = array<i64: 2>, scalar_prefetch = 0 : i64, scratch_operands = 1 : i64, tpu.core_type = #tpu.core_type<tc>, window_params = [{transform_indices = @transform_0, window_bounds = array<i64: 8, 32, 256>}, {pipeline_mode = #tpu.pipeline_mode<synchronous>, transform_indices = @transform_1, window_bounds = array<i64: 8, 32>}, {pipeline_mode = #tpu.pipeline_mode<synchronous>, transform_indices = @transform_2, window_bounds = array<i64: 8, 1>}, {pipeline_mode = #tpu.pipeline_mode<synchronous>, transform_indices = @transform_3, window_bounds = array<i64: 8, 256, 128>}, {pipeline_mode = #tpu.pipeline_mode<synchronous>, transform_indices = @transform_4, window_bounds = array<i64: 1, 128>}, {transform_indices = @transform_5, window_bounds = array<i64: 8, 128>}]} {
    %c0 = arith.constant 0 : index
    %c0_0 = arith.constant 0 : index
    %0 = vector.load %arg2[%c0, %c0_0] : memref<8x32xbf16, #tpu.memory_space<vmem>>, vector<8x32xbf16>
    %c0_1 = arith.constant 0 : index
    %c0_2 = arith.constant 0 : index
    %1 = vector.load %arg3[%c0_1, %c0_2] : memref<8x1xf32, #tpu.memory_space<vmem>>, vector<8x1xf32>
    %2 = vector.shape_cast %1 : vector<8x1xf32> to vector<8x1xf32>
    %3 = vector.broadcast %2 : vector<8x1xf32> to vector<8x256xf32>
    %c0_i32 = arith.constant 0 : i32
    %c8_i32 = arith.constant 8 : i32
    %4 = arith.addi %c0_i32, %c8_i32 : i32
    %c1_i32 = arith.constant 1 : i32
    scf.for %arg8 = %c0_i32 to %4 step %c1_i32  : i32 {
      %59 = arith.index_cast %arg8 : i32 to index
      %c0_36 = arith.constant 0 : index
      %c0_37 = arith.constant 0 : index
      %60 = vector.load %arg1[%59, %c0_36, %c0_37] : memref<8x32x256xbf16, #tpu.memory_space<vmem>>, vector<1x32x256xbf16>
      %61 = vector.shape_cast %60 : vector<1x32x256xbf16> to vector<32x256xbf16>
      %cst_38 = arith.constant dense<0.000000e+00> : vector<8x256xf32>
      %62 = tpu.matmul %0, %61, %cst_38 {dimension_numbers = #tpu.dot_dimension_numbers<[1], [0], [0], [1], [0, 0, 1, 1], [], []>} : vector<8x32xbf16>, vector<32x256xbf16>, vector<8x256xf32> -> vector<8x256xf32>
      %63 = arith.addf %62, %3 : vector<8x256xf32>
      %cst_39 = arith.constant 0.000000e+00 : f32
      %64 = vector.broadcast %cst_39 : f32 to vector<8x256xf32>
      %65 = arith.maximumf %63, %64 : vector<8x256xf32>
      %66 = arith.truncf %65 : vector<8x256xf32> to vector<8x256xbf16>
      %67 = arith.index_cast %arg8 : i32 to index
      %c0_40 = arith.constant 0 : index
      %c0_41 = arith.constant 0 : index
      %68 = vector.load %arg7[%67, %c0_40, %c0_41] : memref<8x8x256xbf16, #tpu.memory_space<vmem>>, vector<1x8x256xbf16>
      %69 = vector.shape_cast %68 : vector<1x8x256xbf16> to vector<8x256xbf16>
      %70 = vector.shape_cast %66 : vector<8x256xbf16> to vector<1x8x256xbf16>
      tpu.vector_store %arg7[%67, %c0_40, %c0_41], %70 {strides = array<i32>} : memref<8x8x256xbf16, #tpu.memory_space<vmem>>, vector<1x8x256xbf16>,
    }
    %c8_i32_3 = arith.constant 8 : i32
    %c0_4 = arith.constant 0 : index
    %c0_5 = arith.constant 0 : index
    %c0_6 = arith.constant 0 : index
    %5 = vector.load %arg7[%c0_4, %c0_5, %c0_6] : memref<8x8x256xbf16, #tpu.memory_space<vmem>>, vector<8x8x256xbf16>
    %cst = arith.constant 0.000000e+00 : f32
    %6 = vector.broadcast %cst : f32 to vector<8x128xf32>
    %7 = vector.extract_strided_slice %5 {offsets = [0, 0, 0], sizes = [8, 1, 256], strides = [1, 1, 1]} : vector<8x8x256xbf16> to vector<8x1x256xbf16>
    %8 = vector.shape_cast %7 : vector<8x1x256xbf16> to vector<8x256xbf16>
    %c0_7 = arith.constant 0 : index
    %c0_8 = arith.constant 0 : index
    %c0_9 = arith.constant 0 : index
    %9 = vector.load %arg4[%c0_7, %c0_8, %c0_9] : memref<8x256x128xbf16, #tpu.memory_space<vmem>>, vector<1x256x128xbf16>
    %10 = vector.shape_cast %9 : vector<1x256x128xbf16> to vector<256x128xbf16>
    %cst_10 = arith.constant dense<0.000000e+00> : vector<8x128xf32>
    %11 = tpu.matmul %8, %10, %cst_10 {dimension_numbers = #tpu.dot_dimension_numbers<[1], [0], [0], [1], [0, 0, 1, 1], [], []>} : vector<8x256xbf16>, vector<256x128xbf16>, vector<8x128xf32> -> vector<8x128xf32>
    %12 = arith.addf %6, %11 : vector<8x128xf32>
    %13 = vector.extract_strided_slice %5 {offsets = [0, 1, 0], sizes = [8, 1, 256], strides = [1, 1, 1]} : vector<8x8x256xbf16> to vector<8x1x256xbf16>
    %14 = vector.shape_cast %13 : vector<8x1x256xbf16> to vector<8x256xbf16>
    %c1 = arith.constant 1 : index
    %c0_11 = arith.constant 0 : index
    %c0_12 = arith.constant 0 : index
    %15 = vector.load %arg4[%c1, %c0_11, %c0_12] : memref<8x256x128xbf16, #tpu.memory_space<vmem>>, vector<1x256x128xbf16>
    %16 = vector.shape_cast %15 : vector<1x256x128xbf16> to vector<256x128xbf16>
    %cst_13 = arith.constant dense<0.000000e+00> : vector<8x128xf32>
    %17 = tpu.matmul %14, %16, %cst_13 {dimension_numbers = #tpu.dot_dimension_numbers<[1], [0], [0], [1], [0, 0, 1, 1], [], []>} : vector<8x256xbf16>, vector<256x128xbf16>, vector<8x128xf32> -> vector<8x128xf32>
    %18 = arith.addf %12, %17 : vector<8x128xf32>
    %19 = vector.extract_strided_slice %5 {offsets = [0, 2, 0], sizes = [8, 1, 256], strides = [1, 1, 1]} : vector<8x8x256xbf16> to vector<8x1x256xbf16>
    %20 = vector.shape_cast %19 : vector<8x1x256xbf16> to vector<8x256xbf16>
    %c2 = arith.constant 2 : index
    %c0_14 = arith.constant 0 : index
    %c0_15 = arith.constant 0 : index
    %21 = vector.load %arg4[%c2, %c0_14, %c0_15] : memref<8x256x128xbf16, #tpu.memory_space<vmem>>, vector<1x256x128xbf16>
    %22 = vector.shape_cast %21 : vector<1x256x128xbf16> to vector<256x128xbf16>
    %cst_16 = arith.constant dense<0.000000e+00> : vector<8x128xf32>
    %23 = tpu.matmul %20, %22, %cst_16 {dimension_numbers = #tpu.dot_dimension_numbers<[1], [0], [0], [1], [0, 0, 1, 1], [], []>} : vector<8x256xbf16>, vector<256x128xbf16>, vector<8x128xf32> -> vector<8x128xf32>
    %24 = arith.addf %18, %23 : vector<8x128xf32>
    %25 = vector.extract_strided_slice %5 {offsets = [0, 3, 0], sizes = [8, 1, 256], strides = [1, 1, 1]} : vector<8x8x256xbf16> to vector<8x1x256xbf16>
    %26 = vector.shape_cast %25 : vector<8x1x256xbf16> to vector<8x256xbf16>
    %c3 = arith.constant 3 : index
    %c0_17 = arith.constant 0 : index
    %c0_18 = arith.constant 0 : index
    %27 = vector.load %arg4[%c3, %c0_17, %c0_18] : memref<8x256x128xbf16, #tpu.memory_space<vmem>>, vector<1x256x128xbf16>
    %28 = vector.shape_cast %27 : vector<1x256x128xbf16> to vector<256x128xbf16>
    %cst_19 = arith.constant dense<0.000000e+00> : vector<8x128xf32>
    %29 = tpu.matmul %26, %28, %cst_19 {dimension_numbers = #tpu.dot_dimension_numbers<[1], [0], [0], [1], [0, 0, 1, 1], [], []>} : vector<8x256xbf16>, vector<256x128xbf16>, vector<8x128xf32> -> vector<8x128xf32>
    %30 = arith.addf %24, %29 : vector<8x128xf32>
    %31 = vector.extract_strided_slice %5 {offsets = [0, 4, 0], sizes = [8, 1, 256], strides = [1, 1, 1]} : vector<8x8x256xbf16> to vector<8x1x256xbf16>
    %32 = vector.shape_cast %31 : vector<8x1x256xbf16> to vector<8x256xbf16>
    %c4 = arith.constant 4 : index
    %c0_20 = arith.constant 0 : index
    %c0_21 = arith.constant 0 : index
    %33 = vector.load %arg4[%c4, %c0_20, %c0_21] : memref<8x256x128xbf16, #tpu.memory_space<vmem>>, vector<1x256x128xbf16>
    %34 = vector.shape_cast %33 : vector<1x256x128xbf16> to vector<256x128xbf16>
    %cst_22 = arith.constant dense<0.000000e+00> : vector<8x128xf32>
    %35 = tpu.matmul %32, %34, %cst_22 {dimension_numbers = #tpu.dot_dimension_numbers<[1], [0], [0], [1], [0, 0, 1, 1], [], []>} : vector<8x256xbf16>, vector<256x128xbf16>, vector<8x128xf32> -> vector<8x128xf32>
    %36 = arith.addf %30, %35 : vector<8x128xf32>
    %37 = vector.extract_strided_slice %5 {offsets = [0, 5, 0], sizes = [8, 1, 256], strides = [1, 1, 1]} : vector<8x8x256xbf16> to vector<8x1x256xbf16>
    %38 = vector.shape_cast %37 : vector<8x1x256xbf16> to vector<8x256xbf16>
    %c5 = arith.constant 5 : index
    %c0_23 = arith.constant 0 : index
    %c0_24 = arith.constant 0 : index
    %39 = vector.load %arg4[%c5, %c0_23, %c0_24] : memref<8x256x128xbf16, #tpu.memory_space<vmem>>, vector<1x256x128xbf16>
    %40 = vector.shape_cast %39 : vector<1x256x128xbf16> to vector<256x128xbf16>
    %cst_25 = arith.constant dense<0.000000e+00> : vector<8x128xf32>
    %41 = tpu.matmul %38, %40, %cst_25 {dimension_numbers = #tpu.dot_dimension_numbers<[1], [0], [0], [1], [0, 0, 1, 1], [], []>} : vector<8x256xbf16>, vector<256x128xbf16>, vector<8x128xf32> -> vector<8x128xf32>
    %42 = arith.addf %36, %41 : vector<8x128xf32>
    %43 = vector.extract_strided_slice %5 {offsets = [0, 6, 0], sizes = [8, 1, 256], strides = [1, 1, 1]} : vector<8x8x256xbf16> to vector<8x1x256xbf16>
    %44 = vector.shape_cast %43 : vector<8x1x256xbf16> to vector<8x256xbf16>
    %c6 = arith.constant 6 : index
    %c0_26 = arith.constant 0 : index
    %c0_27 = arith.constant 0 : index
    %45 = vector.load %arg4[%c6, %c0_26, %c0_27] : memref<8x256x128xbf16, #tpu.memory_space<vmem>>, vector<1x256x128xbf16>
    %46 = vector.shape_cast %45 : vector<1x256x128xbf16> to vector<256x128xbf16>
    %cst_28 = arith.constant dense<0.000000e+00> : vector<8x128xf32>
    %47 = tpu.matmul %44, %46, %cst_28 {dimension_numbers = #tpu.dot_dimension_numbers<[1], [0], [0], [1], [0, 0, 1, 1], [], []>} : vector<8x256xbf16>, vector<256x128xbf16>, vector<8x128xf32> -> vector<8x128xf32>
    %48 = arith.addf %42, %47 : vector<8x128xf32>
    %49 = vector.extract_strided_slice %5 {offsets = [0, 7, 0], sizes = [8, 1, 256], strides = [1, 1, 1]} : vector<8x8x256xbf16> to vector<8x1x256xbf16>
    %50 = vector.shape_cast %49 : vector<8x1x256xbf16> to vector<8x256xbf16>
    %c7 = arith.constant 7 : index
    %c0_29 = arith.constant 0 : index
    %c0_30 = arith.constant 0 : index
    %51 = vector.load %arg4[%c7, %c0_29, %c0_30] : memref<8x256x128xbf16, #tpu.memory_space<vmem>>, vector<1x256x128xbf16>
    %52 = vector.shape_cast %51 : vector<1x256x128xbf16> to vector<256x128xbf16>
    %cst_31 = arith.constant dense<0.000000e+00> : vector<8x128xf32>
    %53 = tpu.matmul %50, %52, %cst_31 {dimension_numbers = #tpu.dot_dimension_numbers<[1], [0], [0], [1], [0, 0, 1, 1], [], []>} : vector<8x256xbf16>, vector<256x128xbf16>, vector<8x128xf32> -> vector<8x128xf32>
    %54 = arith.addf %48, %53 : vector<8x128xf32>
    %c0_32 = arith.constant 0 : index
    %c0_33 = arith.constant 0 : index
    %55 = vector.load %arg5[%c0_32, %c0_33] : memref<1x128xf32, #tpu.memory_space<vmem>>, vector<1x128xf32>
    %56 = vector.broadcast %55 : vector<1x128xf32> to vector<8x128xf32>
    %57 = arith.addf %54, %56 : vector<8x128xf32>
    %c0_34 = arith.constant 0 : index
    %c0_35 = arith.constant 0 : index
    %58 = vector.load %arg6[%c0_34, %c0_35] : memref<8x128xf32, #tpu.memory_space<vmem>>, vector<8x128xf32>
    tpu.vector_store %arg6[%c0_34, %c0_35], %57 {strides = array<i32>} : memref<8x128xf32, #tpu.memory_space<vmem>>, vector<8x128xf32>,
    return
  }
  func.func @transform_0(%arg0: i32) -> (i32, i32, i32) {
    %c0_i32 = arith.constant 0 : i32
    %c0_i32_0 = arith.constant 0 : i32
    %c0_i32_1 = arith.constant 0 : i32
    return %arg0, %c0_i32, %c0_i32_0 : i32, i32, i32
  }
  func.func @transform_1(%arg0: i32) -> (i32, i32) {
    %c0_i32 = arith.constant 0 : i32
    %c0_i32_0 = arith.constant 0 : i32
    %c0_i32_1 = arith.constant 0 : i32
    return %c0_i32, %c0_i32_0 : i32, i32
  }
  func.func @transform_2(%arg0: i32) -> (i32, i32) {
    %c0_i32 = arith.constant 0 : i32
    %c0_i32_0 = arith.constant 0 : i32
    %c0_i32_1 = arith.constant 0 : i32
    return %c0_i32, %c0_i32_0 : i32, i32
  }
  func.func @transform_3(%arg0: i32) -> (i32, i32, i32) {
    %c0_i32 = arith.constant 0 : i32
    %c0_i32_0 = arith.constant 0 : i32
    %c0_i32_1 = arith.constant 0 : i32
    %c0_i32_2 = arith.constant 0 : i32
    return %c0_i32, %c0_i32_0, %c0_i32_1 : i32, i32, i32
  }
  func.func @transform_4(%arg0: i32) -> (i32, i32) {
    %c0_i32 = arith.constant 0 : i32
    %c0_i32_0 = arith.constant 0 : i32
    %c0_i32_1 = arith.constant 0 : i32
    return %c0_i32, %c0_i32_0 : i32, i32
  }
  func.func @transform_5(%arg0: i32) -> (i32, i32) {
    %c0_i32 = arith.constant 0 : i32
    %c0_i32_0 = arith.constant 0 : i32
    return %arg0, %c0_i32 : i32, i32
  }
}

</mosaic_0001>

<llo_original>
// kernel: graft_layer_forward.1
$region0: #{graft_layer_forward.1}
  #allocation0 [shape = 'u32[]', space=smem, size = 0x4, offset = 0x4, fixed_abs, tag = 'smem constant byte address 0x4 - core index']
  #allocation1 [shape = 'u32[144,128]{1,0:T(1,128)}', space=vmem, size = 0x12000, scoped, tag = 'internal scratch']
  #allocation2 [shape = 'bf16[8,8,256]{2,1,0:T(8,128)(2,1)}', space=vmem, size = 0x8000, scoped, tag = 'scratch operand']
  %s0 = inlined_call_operand.vmem [shape: bf16[16,32,256], index: 0, kind: input, shape index: {}]
  %s1 = inlined_call_operand.vmem [shape: bf16[8,32], index: 1, kind: input, shape index: {}]
  %s2 = inlined_call_operand.vmem [shape: f32[8,1], index: 2, kind: input, shape index: {}]
  %s3 = inlined_call_operand.vmem [shape: bf16[8,256,128], index: 3, kind: input, shape index: {}]
  %s4 = inlined_call_operand.vmem [shape: f32[1,128], index: 4, kind: input, shape index: {}]
  %s5 = inlined_call_operand.hbm [shape: f32[16,128], index: 5, kind: output, shape index: {}]
  %s6 = sld [smem:[#allocation0]]
  $region60: #{graft_layer_forward.1} parent=0
    _
  %s8 = ssub.s32 1, %s6
  %s9 = scalar_select 0, %s8, %s6
  $region1: #{graft_layer_forward.1} parent=0
    #allocation3 [shape = 'u8[8192]{0}', space=vmem, size = 0x2000, scoped, tag = 'output window, operand 0']
    #allocation4 [shape = 's32[2]{0}', space=sflag, size = 0x8, scoped, tag = 'scoped memory for graft_layer_forward.1']
    %10 = vsyncpa [#allocation4], 0
    %s11 = scalar_lea.sflag [#allocation4], 1
    %12 = vsyncpa %s11, 0
    loop: start=0, step=1, limit=4
    $region2: #{graft_layer_forward.1} parent=1 // loop_pre_header
      _
    $region3: #{graft_layer_forward.1} parent=1 // loop_header
      %s14 = sphi 0, %s18
      %p15 = scmp.ge.s32.totalorder %s14, 4
      %s24 = sphi 0, %s26
      %s27 = sphi 0, %s24
      %s28 = sphi 0, %s27
      %s44 = sphi 0, %s28
      %s48 = sphi 0, %s48
      %s50 = sphi 0, %s48
      %s51 = sphi 0, %s50
      %s65 = sphi 0, %s51
      %s69 = sphi 0, %s69
      %s71 = sphi 0, %s69
      %s72 = sphi 0, %s71
      %s86 = sphi 0, %s72
      %s90 = sphi 0, %s90
      %s92 = sphi 0, %s90
      %s93 = sphi 0, %s92
      %s107 = sphi 0, %s93
      %s111 = sphi 0, %s111
      %s113 = sphi 0, %s111
      %s114 = sphi 0, %s113
      %s128 = sphi 0, %s114
      %s134 = sphi 0, %s136
      %s137 = sphi 0, %s134
      %s138 = sphi 0, %s137
      %s154 = sphi 0, %s138
    $region4: #{graft_layer_forward.1} parent=1 // loop_header_branch
      %17 = sbr.rel (%p15) target = $region8
    $region5: #{graft_layer_forward.1} parent=1 // loop_body
      %s19 = ssub.s32 %s14, 1
      %s20 = ssub.s32 %s14, 2
      %s21 = sadd.s32 %s14, 1
      %s22 = ssub.s32 %s14, %s21
      %p23 = scmp.eq.s32.totalorder %s22, 0
      %s25 = sadd.s32 %s24, 1
      %s26 = scalar_select %p23, %s24, %s25
      %p29 = pneg %p23
      %p30 = scmp.eq.s32.totalorder %s14, 1
      %p31 = por %p29, %p30
      %p32 = scmp.ne.s32.totalorder %s24, %s27
      %p33 = scmp.eq.s32.totalorder %s14, 0
      %p34 = por %p32, %p33
      %p35 = scmp.ne.s32.totalorder %s24, %s27
      %p36 = scmp.eq.s32.totalorder %s19, 1
      %p37 = por %p35, %p36
      %p38 = scmp.ne.s32.totalorder %s27, %s28
      %p39 = scmp.eq.s32.totalorder %s19, 0
      %p40 = por %p38, %p39
      %p41 = scmp.ne.s32.totalorder %s27, %s28
      %p42 = scmp.eq.s32.totalorder %s20, 1
      %p43 = por %p41, %p42
      %p45 = scmp.ne.s32.totalorder %s28, %s44
      %p46 = scmp.eq.s32.totalorder %s20, 0
      %p47 = por %p45, %p46
      %s49 = sadd.s32 %s48, 1
      %p52 = scmp.eq.s32.totalorder %s14, 1
      %p53 = scmp.ne.s32.totalorder %s48, %s50
      %p54 = scmp.eq.s32.totalorder %s14, 0
      %p55 = por %p53, %p54
      %p56 = scmp.ne.s32.totalorder %s48, %s50
      %p57 = scmp.eq.s32.totalorder %s19, 1
      %p58 = por %p56, %p57
      %p59 = scmp.ne.s32.totalorder %s50, %s51
      %p60 = scmp.eq.s32.totalorder %s19, 0
      %p61 = por %p59, %p60
      %p62 = scmp.ne.s32.totalorder %s50, %s51
      %p63 = scmp.eq.s32.totalorder %s20, 1
      %p64 = por %p62, %p63
      %p66 = scmp.ne.s32.totalorder %s51, %s65
      %p67 = scmp.eq.s32.totalorder %s20, 0
      %p68 = por %p66, %p67
      %s70 = sadd.s32 %s69, 1
      %p73 = scmp.eq.s32.totalorder %s14, 1
      %p74 = scmp.ne.s32.totalorder %s69, %s71
      %p75 = scmp.eq.s32.totalorder %s14, 0
      %p76 = por %p74, %p75
      %p77 = scmp.ne.s32.totalorder %s69, %s71
      %p78 = scmp.eq.s32.totalorder %s19, 1
      %p79 = por %p77, %p78
      %p80 = scmp.ne.s32.totalorder %s71, %s72
      %p81 = scmp.eq.s32.totalorder %s19, 0
      %p82 = por %p80, %p81
      %p83 = scmp.ne.s32.totalorder %s71, %s72
      %p84 = scmp.eq.s32.totalorder %s20, 1
      %p85 = por %p83, %p84
      %p87 = scmp.ne.s32.totalorder %s72, %s86
      %p88 = scmp.eq.s32.totalorder %s20, 0
      %p89 = por %p87, %p88
      %s91 = sadd.s32 %s90, 1
      %p94 = scmp.eq.s32.totalorder %s14, 1
      %p95 = scmp.ne.s32.totalorder %s90, %s92
      %p96 = scmp.eq.s32.totalorder %s14, 0
      %p97 = por %p95, %p96
      %p98 = scmp.ne.s32.totalorder %s90, %s92
      %p99 = scmp.eq.s32.totalorder %s19, 1
      %p100 = por %p98, %p99
      %p101 = scmp.ne.s32.totalorder %s92, %s93
      %p102 = scmp.eq.s32.totalorder %s19, 0
      %p103 = por %p101, %p102
      %p104 = scmp.ne.s32.totalorder %s92, %s93
      %p105 = scmp.eq.s32.totalorder %s20, 1
      %p106 = por %p104, %p105
      %p108 = scmp.ne.s32.totalorder %s93, %s107
      %p109 = scmp.eq.s32.totalorder %s20, 0
      %p110 = por %p108, %p109
      %s112 = sadd.s32 %s111, 1
      %p115 = scmp.eq.s32.totalorder %s14, 1
      %p116 = scmp.ne.s32.totalorder %s111, %s113
      %p117 = scmp.eq.s32.totalorder %s14, 0
      %p118 = por %p116, %p117
      %p119 = scmp.ne.s32.totalorder %s111, %s113
      %p120 = scmp.eq.s32.totalorder %s19, 1
      %p121 = por %p119, %p120
      %p122 = scmp.ne.s32.totalorder %s113, %s114
      %p123 = scmp.eq.s32.totalorder %s19, 0
      %p124 = por %p122, %p123
      %p125 = scmp.ne.s32.totalorder %s113, %s114
      %p126 = scmp.eq.s32.totalorder %s20, 1
      %p127 = por %p125, %p126
      %p129 = scmp.ne.s32.totalorder %s114, %s128
      %p130 = scmp.eq.s32.totalorder %s20, 0
      %p131 = por %p129, %p130
      %s132 = ssub.s32 %s14, %s21
      %p133 = scmp.eq.s32.totalorder %s132, 0
      %s135 = sadd.s32 %s134, 1
      %s136 = scalar_select %p133, %s134, %s135
      %p139 = pneg %p133
      %p140 = scmp.eq.s32.totalorder %s14, 1
      %p141 = por %p139, %p140
      %p142 = scmp.ne.s32.totalorder %s134, %s137
      %p143 = scmp.eq.s32.totalorder %s14, 0
      %p144 = por %p142, %p143
      %p145 = scmp.ne.s32.totalorder %s134, %s137
      %p146 = scmp.eq.s32.totalorder %s19, 1
      %p147 = por %p145, %p146
      %p148 = scmp.ne.s32.totalorder %s137, %s138
      %p149 = scmp.eq.s32.totalorder %s19, 0
      %p150 = por %p148, %p149
      %p151 = scmp.ne.s32.totalorder %s137, %s138
      %p152 = scmp.eq.s32.totalorder %s20, 1
      %p153 = por %p151, %p152
      %p155 = scmp.ne.s32.totalorder %s138, %s154
      %p156 = scmp.eq.s32.totalorder %s20, 0
      %p157 = por %p155, %p156
      %p158 = scmp.le.s32.totalorder 1, %s14
      %p159 = scmp.lt.s32.totalorder %s14, 3
      %p160 = pnand %p158, %p159
      %p161 = pneg %p160
      // Predicated region
      $region9: #{graft_layer_forward.1} parent=5 // pred_check
        _
      $region10: #{graft_layer_forward.1} parent=5 // pred_check_branch
        %163 = sbr.rel (%p160) target = $region12
      $region11: #{graft_layer_forward.1} parent=5 // pred_region
        %s164 = ssub.s32 %s14, 1
        // Predicated region
        $region13: #{graft_layer_forward.1} parent=11 // pred_check
          %p165 = pneg %p61
        $region14: #{graft_layer_forward.1} parent=11 // pred_check_branch
          %167 = sbr.rel (%p165) target = $region16
        $region15: #{graft_layer_forward.1} parent=11 // pred_region
          _
        $region16: #{graft_layer_forward.1} parent=11 // pred_fallthru
          _
        // Predicated region
        $region17: #{graft_layer_forward.1} parent=11 // pred_check
          %p168 = pneg %p82
        $region18: #{graft_layer_forward.1} parent=11 // pred_check_branch
          %170 = sbr.rel (%p168) target = $region20
        $region19: #{graft_layer_forward.1} parent=11 // pred_region
          _
        $region20: #{graft_layer_forward.1} parent=11 // pred_fallthru
          _
        // Predicated region
        $region21: #{graft_layer_forward.1} parent=11 // pred_check
          %p171 = pneg %p103
        $region22: #{graft_layer_forward.1} parent=11 // pred_check_branch
          %173 = sbr.rel (%p171) target = $region24
        $region23: #{graft_layer_forward.1} parent=11 // pred_region
          _
        $region24: #{graft_layer_forward.1} parent=11 // pred_fallthru
          _
        // Predicated region
        $region25: #{graft_layer_forward.1} parent=11 // pred_check
          %p174 = pneg %p124
        $region26: #{graft_layer_forward.1} parent=11 // pred_check_branch
          %176 = sbr.rel (%p174) target = $region28
        $region27: #{graft_layer_forward.1} parent=11 // pred_region
          _
        $region28: #{graft_layer_forward.1} parent=11 // pred_fallthru
          _
      $region12: #{graft_layer_forward.1} parent=5 // pred_fallthru
        _
      %p177 = scmp.lt.s32.totalorder %s14, 2
      // Predicated region
      $region29: #{graft_layer_forward.1} parent=5 // pred_check
        %p178 = pneg %p177
      $region30: #{graft_layer_forward.1} parent=5 // pred_check_branch
        %180 = sbr.rel (%p178) target = $region32
      $region31: #{graft_layer_forward.1} parent=5 // pred_region
        // Predicated region
        $region33: #{graft_layer_forward.1} parent=31 // pred_check
          %p181 = pneg %p34
        $region34: #{graft_layer_forward.1} parent=31 // pred_check_branch
          %183 = sbr.rel (%p181) target = $region36
        $region35: #{graft_layer_forward.1} parent=31 // pred_region
          %s184 = smul.u32 8, %s14
          %p185 = scmp.lt.s32.totalorder %s184, 15
          %s186 = scalar_select %p185, %s184, 15
          %s187 = smul.addr %s186, 8
          %s188 = smul.addr %s187, 4
          %s189 = scalar_lea.vmem %s0, %s188
          %s190 = smul.u32 8, %s14
        $region36: #{graft_layer_forward.1} parent=31 // pred_fallthru
          _
      $region32: #{graft_layer_forward.1} parent=5 // pred_fallthru
        _
      %p191 = scmp.le.s32.totalorder 1, %s14
      %p192 = scmp.lt.s32.totalorder %s14, 3
      %p193 = pnand %p191, %p192
      %p194 = pneg %p193
      // Predicated region
      $region37: #{graft_layer_forward.1} parent=5 // pred_check
        _
      $region38: #{graft_layer_forward.1} parent=5 // pred_check_branch
        %196 = sbr.rel (%p193) target = $region40
      $region39: #{graft_layer_forward.1} parent=5 // pred_region
        %s197 = ssub.s32 %s14, 1
        %s198 = smul.u32 8, %s19
        %p199 = scmp.lt.s32.totalorder %s198, 15
        %s200 = scalar_select %p199, %s198, 15
        %s201 = smul.addr %s200, 8
        %s202 = smul.addr %s201, 4
        %s203 = scalar_lea.vmem %s0, %s202
        %p204 = pneg %p40
        %p205 = pneg %p37
        %p206 = pneg %p61
        %p207 = pneg %p58
        %p208 = pneg %p82
        %p209 = pneg %p79
        %p210 = pneg %p103
        %p211 = pneg %p100
        %p212 = pneg %p124
        %p213 = pneg %p121
        %p214 = pneg %p150
        %p215 = pneg %p147
        %s216 = sand.u32 %s137, 1
        %s217 = scalar_lea.sflag [#allocation4], %s216
        %s218 = sand.u32 %s137, 1
        %s219 = smul.addr %s218, 8
        %s220 = scalar_lea.vmem [#allocation3], %s219
        %s221 = smul.u32 8, %s19
        %p222 = scmp.lt.s32.totalorder %s221, 15
        %s223 = scalar_select %p222, %s221, 15
        %s224 = smul.addr %s223, 8
        %s225 = smul.addr %s224, 4
        %s226 = scalar_lea.vmem %s0, %s225
        %s227 = smul.u32 8, %s19
        %v229 = vld [vmem:[%s1] sm:$0xf]
        %v230 = vld [vmem:[%s2] sm:$0xff]
        %232 = vset.pattern.permute.xlu0 0
        %233 = vperm.xlu0 %232, %v230
        %v234 = vpop.permute.xlu0 %233
        loop: start=0, step=1, limit=8
        $region41: #{graft_layer_forward.1} parent=39 // loop_pre_header
          _
        $region42: #{graft_layer_forward.1} parent=39 // loop_header
          %s237 = sphi 0, %s241
          %p238 = scmp.ge.s32.totalorder %s237, 8
        $region43: #{graft_layer_forward.1} parent=39 // loop_header_branch
          %240 = sbr.rel (%p238) target = $region47
        $region44: #{graft_layer_forward.1} parent=39 // loop_body
          %s242 = smul.u32 %s237, 8
          %s243 = smul.addr %s242, 4
          %s244 = scalar_lea.vmem %s226, %s243
          %v245 = vld [vmem:[%s244] sm:$0xff]
          %v246 = vld [vmem:[%s244 + $0x8] sm:$0xff]
          %v247 = vld [vmem:[%s244 + $0x10] sm:$0xff]
          %v248 = vld [vmem:[%s244 + $0x18] sm:$0xff]
          %v253 = vunpack.c.l.b16 %v245
          %v254 = vunpack.c.h.b16 %v245
          %v255 = vunpack.c.l.b16 %v246
          %v256 = vunpack.c.h.b16 %v246
          %v257 = vunpack.c.l.b16 %v247
          %v258 = vunpack.c.h.b16 %v247
          %v259 = vunpack.c.l.b16 %v248
          %v260 = vunpack.c.h.b16 %v248
          %v261 = vpack.c.b16 %v255, %v253
          %v262 = vpack.c.b16 %v256, %v254
          %v263 = vpack.c.b16 %v259, %v257
          %v264 = vpack.c.b16 %v260, %v258
          %vm269 = vcmask 261120
          %v271 = vsel %vm269, %v229, 0
          %273 = vmatprep.subr.bf16.mxu0 %v262
          %274 = vmatpush1.bf16.msra.mxu0 %v261
          %275 = vmatprep.subr.bf16.mxu0 %v264
          %276 = vmatpush1.bf16.msra.mxu0 %v263
          %277 = vmatprep.subr.bf16.mxu0 0
          %278 = vmatpush1.bf16.msra.mxu0 0
          %279 = vmatprep.subr.bf16.mxu0 0
          %280 = vmatpush1.bf16.msra.mxu0 0
          %281 = vmatprep.subr.bf16.mxu0 0
          %282 = vmatpush1.bf16.msra.mxu0 0
          %283 = vmatprep.subr.bf16.mxu0 0
          %284 = vmatpush1.bf16.msra.mxu0 0
          %285 = vmatprep.subr.bf16.mxu0 0
          %286 = vmatpush1.bf16.msra.mxu0 0
          %287 = vmatprep.subr.bf16.mxu0 0
          %288 = vmatpush1.bf16.msra.mxu0 0
          %289 = vmatprep.subr.bf16.mxu0 0
          %290 = vmatpush1.bf16.msra.mxu0 0
          %291 = vmatprep.subr.bf16.mxu0 0
          %292 = vmatpush1.bf16.msra.mxu0 0
          %293 = vmatprep.subr.bf16.mxu0 0
          %294 = vmatpush1.bf16.msra.mxu0 0
          %295 = vmatprep.subr.bf16.mxu0 0
          %296 = vmatpush1.bf16.msra.mxu0 0
          %297 = vmatprep.subr.bf16.mxu0 0
          %298 = vmatpush1.bf16.msra.mxu0 0
          %299 = vmatprep.subr.bf16.mxu0 0
          %300 = vmatpush1.bf16.msra.mxu0 0
          %301 = vmatprep.subr.bf16.mxu0 0
          %302 = vmatpush1.bf16.msra.mxu0 0
          %303 = vmatprep.subr.bf16.mxu0 0
          %304 = vmatpush1.bf16.msra.mxu0 0
          %305 = vmatprep.mubr.bf16.mxu0 0
          %306 = vmatmul.mubr.bf16.gmra.mrb[0].mxu0 %v271
          %v307 = vpop.f32.mrb[0].mxu0
          %v308 = vadd.f32 %v234, %v307
          %v309 = vpop.f32.mrb[0].mxu0
          %v310 = vadd.f32 %v234, %v309
          %v311 = vpop.f32.mrb[0].mxu0
          %v312 = vpop.f32.mrb[0].mxu0
          %313 = vdwg.mxu0
          %v314 = vmax.f32 %v308, 0.0
          %v315 = vmax.f32 %v310, 0.0
          %v316 = vpack.c.bf16 %v314, %v314
          %v317 = vpack.c.bf16 %v315, %v315
          %v320 = vunpack.c.l.b16 %v316
          %v321 = vunpack.c.l.b16 %v317
          %v322 = vpack.c.b16 %v321, %v320
          %s324 = smul.u32 %s237, 2
          %s325 = smul.addr %s324, 4
          %s326 = scalar_lea.vmem [#allocation2], %s325
          %327 = vst [vmem:[%s326] sm:$0xff] %v322
        $region45: #{graft_layer_forward.1} parent=39 // loop_footer
          %s241 = sadd.s32 1, %s237
        $region46: #{graft_layer_forward.1} parent=39 // loop_footer_branch
          %236 = sbr.rel target = $region42
        $region47: #{graft_layer_forward.1} parent=39 // loop_exit
          _
        %v328 = vld [vmem:[#allocation2] sm:$0xff]
        %v329 = vld [vmem:[#allocation2 + $0x8] sm:$0xff]
        %v330 = vld [vmem:[#allocation2 + $0x10] sm:$0xff]
        %v331 = vld [vmem:[#allocation2 + $0x18] sm:$0xff]
        %v332 = vld [vmem:[#allocation2 + $0x20] sm:$0xff]
        %v333 = vld [vmem:[#allocation2 + $0x28] sm:$0xff]
        %v334 = vld [vmem:[#allocation2 + $0x30] sm:$0xff]
        %v335 = vld [vmem:[#allocation2 + $0x38] sm:$0xff]
        %v336 = vld [vmem:[%s3] sm:$0xf]
        %v337 = vld [vmem:[%s3 + $0x4] sm:$0xf]
        %v338 = vld [vmem:[%s3 + $0x8] sm:$0xf]
        %v339 = vld [vmem:[%s3 + $0xc] sm:$0xf]
        %v340 = vld [vmem:[%s3 + $0x10] sm:$0xf]
        %v341 = vld [vmem:[%s3 + $0x14] sm:$0xf]
        %v342 = vld [vmem:[%s3 + $0x18] sm:$0xf]
        %v343 = vld [vmem:[%s3 + $0x1c] sm:$0xf]
        %v344 = vld [vmem:[%s3 + $0x20] sm:$0xf]
        %v345 = vld [vmem:[%s3 + $0x24] sm:$0xf]
        %v346 = vld [vmem:[%s3 + $0x28] sm:$0xf]
        %v347 = vld [vmem:[%s3 + $0x2c] sm:$0xf]
        %v348 = vld [vmem:[%s3 + $0x30] sm:$0xf]
        %v349 = vld [vmem:[%s3 + $0x34] sm:$0xf]
        %v350 = vld [vmem:[%s3 + $0x38] sm:$0xf]
        %v351 = vld [vmem:[%s3 + $0x3c] sm:$0xf]
        %v352 = vld [vmem:[%s3 + $0x40] sm:$0xf]
        %v353 = vld [vmem:[%s3 + $0x44] sm:$0xf]
        %v354 = vld [vmem:[%s3 + $0x48] sm:$0xf]
        %v355 = vld [vmem:[%s3 + $0x4c] sm:$0xf]
        %v356 = vld [vmem:[%s3 + $0x50] sm:$0xf]
        %v357 = vld [vmem:[%s3 + $0x54] sm:$0xf]
        %v358 = vld [vmem:[%s3 + $0x58] sm:$0xf]
        %v359 = vld [vmem:[%s3 + $0x5c] sm:$0xf]
        %v360 = vld [vmem:[%s3 + $0x60] sm:$0xf]
        %v361 = vld [vmem:[%s3 + $0x64] sm:$0xf]
        %v362 = vld [vmem:[%s3 + $0x68] sm:$0xf]
        %v363 = vld [vmem:[%s3 + $0x6c] sm:$0xf]
        %v364 = vld [vmem:[%s3 + $0x70] sm:$0xf]
        %v365 = vld [vmem:[%s3 + $0x74] sm:$0xf]
        %v366 = vld [vmem:[%s3 + $0x78] sm:$0xf]
        %v367 = vld [vmem:[%s3 + $0x7c] sm:$0xf]
        %s368 = scalar_lea.vmem %s3, 128
        %v369 = vld [vmem:[%s368] sm:$0xf]
        %v370 = vld [vmem:[%s368 + $0x4] sm:$0xf]
        %v371 = vld [vmem:[%s368 + $0x8] sm:$0xf]
        %v372 = vld [vmem:[%s368 + $0xc] sm:$0xf]
        %v373 = vld [vmem:[%s368 + $0x10] sm:$0xf]
        %v374 = vld [vmem:[%s368 + $0x14] sm:$0xf]
        %v375 = vld [vmem:[%s368 + $0x18] sm:$0xf]
        %v376 = vld [vmem:[%s368 + $0x1c] sm:$0xf]
        %v377 = vld [vmem:[%s368 + $0x20] sm:$0xf]
        %v378 = vld [vmem:[%s368 + $0x24] sm:$0xf]
        %v379 = vld [vmem:[%s368 + $0x28] sm:$0xf]
        %v380 = vld [vmem:[%s368 + $0x2c] sm:$0xf]
        %v381 = vld [vmem:[%s368 + $0x30] sm:$0xf]
        %v382 = vld [vmem:[%s368 + $0x34] sm:$0xf]
        %v383 = vld [vmem:[%s368 + $0x38] sm:$0xf]
        %v384 = vld [vmem:[%s368 + $0x3c] sm:$0xf]
        %v385 = vld [vmem:[%s368 + $0x40] sm:$0xf]
        %v386 = vld [vmem:[%s368 + $0x44] sm:$0xf]
        %v387 = vld [vmem:[%s368 + $0x48] sm:$0xf]
        %v388 = vld [vmem:[%s368 + $0x4c] sm:$0xf]
        %v389 = vld [vmem:[%s368 + $0x50] sm:$0xf]
        %v390 = vld [vmem:[%s368 + $0x54] sm:$0xf]
        %v391 = vld [vmem:[%s368 + $0x58] sm:$0xf]
        %v392 = vld [vmem:[%s368 + $0x5c] sm:$0xf]
        %v393 = vld [vmem:[%s368 + $0x60] sm:$0xf]
        %v394 = vld [vmem:[%s368 + $0x64] sm:$0xf]
        %v395 = vld [vmem:[%s368 + $0x68] sm:$0xf]
        %v396 = vld [vmem:[%s368 + $0x6c] sm:$0xf]
        %v397 = vld [vmem:[%s368 + $0x70] sm:$0xf]
        %v398 = vld [vmem:[%s368 + $0x74] sm:$0xf]
        %v399 = vld [vmem:[%s368 + $0x78] sm:$0xf]
        %v400 = vld [vmem:[%s368 + $0x7c] sm:$0xf]
        %v409 = vunpack.c.l.b16 %v328
        %v410 = vunpack.c.h.b16 %v328
        %v411 = vunpack.c.l.b16 %v329
        %v412 = vunpack.c.h.b16 %v329
        %v413 = vunpack.c.l.b16 %v330
        %v414 = vunpack.c.h.b16 %v330
        %v415 = vunpack.c.l.b16 %v331
        %v416 = vunpack.c.h.b16 %v331
        %v417 = vunpack.c.l.b16 %v332
        %v418 = vunpack.c.h.b16 %v332
        %v419 = vunpack.c.l.b16 %v333
        %v420 = vunpack.c.h.b16 %v333
        %v421 = vunpack.c.l.b16 %v334
        %v422 = vunpack.c.h.b16 %v334
        %v423 = vunpack.c.l.b16 %v335
        %v424 = vunpack.c.h.b16 %v335
        %v425 = vpack.c.b16 %v409, %v409
        %v426 = vpack.c.b16 %v410, %v410
        %v427 = vpack.c.b16 %v411, %v411
        %v428 = vpack.c.b16 %v412, %v412
        %v429 = vpack.c.b16 %v413, %v413
        %v430 = vpack.c.b16 %v414, %v414
        %v431 = vpack.c.b16 %v415, %v415
        %v432 = vpack.c.b16 %v416, %v416
        %v433 = vpack.c.b16 %v417, %v417
        %v434 = vpack.c.b16 %v418, %v418
        %v435 = vpack.c.b16 %v419, %v419
        %v436 = vpack.c.b16 %v420, %v420
        %v437 = vpack.c.b16 %v421, %v421
        %v438 = vpack.c.b16 %v422, %v422
        %v439 = vpack.c.b16 %v423, %v423
        %v440 = vpack.c.b16 %v424, %v424
        %v441 = vunpack.c.l.b16 %v425
        %v442 = vunpack.c.l.b16 %v426
        %v443 = vunpack.c.l.b16 %v427
        %v444 = vunpack.c.l.b16 %v428
        %v445 = vunpack.c.l.b16 %v429
        %v446 = vunpack.c.l.b16 %v430
        %v447 = vunpack.c.l.b16 %v431
        %v448 = vunpack.c.l.b16 %v432
        %v449 = vunpack.c.l.b16 %v433
        %v450 = vunpack.c.l.b16 %v434
        %v451 = vunpack.c.l.b16 %v435
        %v452 = vunpack.c.l.b16 %v436
        %v453 = vunpack.c.l.b16 %v437
        %v454 = vunpack.c.l.b16 %v438
        %v455 = vunpack.c.l.b16 %v439
        %v456 = vunpack.c.l.b16 %v440
        %v457 = vrot.slane %v441, 1
        %vm458 = vcmask 1041409
        %v459 = vsel %vm458, %v443, %v457
        %v460 = vrot.slane %v445, 7
        %vm461 = vcmask 1042434
        %v462 = vsel %vm461, %v460, %v459
        %v463 = vrot.slane %v447, 6
        %vm464 = vcmask 1043459
        %v465 = vsel %vm464, %v463, %v462
        %v466 = vrot.slane %v449, 5
        %vm467 = vcmask 1044484
        %v468 = vsel %vm467, %v466, %v465
        %v469 = vrot.slane %v451, 4
        %vm470 = vcmask 1045509
        %v471 = vsel %vm470, %v469, %v468
        %v472 = vrot.slane %v453, 3
        %vm473 = vcmask 1046534
        %v474 = vsel %vm473, %v472, %v471
        %v475 = vrot.slane %v455, 2
        %vm476 = vcmask 1047559
        %v477 = vsel %vm476, %v475, %v474
        %v478 = vrot.slane %v442, 1
        %v479 = vsel %vm458, %v444, %v478
        %v480 = vrot.slane %v446, 7
        %v481 = vsel %vm461, %v480, %v479
        %v482 = vrot.slane %v448, 6
        %v483 = vsel %vm464, %v482, %v481
        %v484 = vrot.slane %v450, 5
        %v485 = vsel %vm467, %v484, %v483
        %v486 = vrot.slane %v452, 4
        %v487 = vsel %vm470, %v486, %v485
        %v488 = vrot.slane %v454, 3
        %v489 = vsel %vm473, %v488, %v487
        %v490 = vrot.slane %v456, 2
        %v491 = vsel %vm476, %v490, %v489
        %v492 = vpack.c.b16 %v477, %v477
        %v493 = vpack.c.b16 %v491, %v491
        %v528 = vunpack.c.l.b16 %v369
        %v529 = vunpack.c.l.b16 %v370
        %v530 = vunpack.c.l.b16 %v371
        %v531 = vunpack.c.l.b16 %v372
        %v532 = vunpack.c.l.b16 %v373
        %v533 = vunpack.c.l.b16 %v374
        %v534 = vunpack.c.l.b16 %v375
        %v535 = vunpack.c.l.b16 %v376
        %v536 = vunpack.c.l.b16 %v377
        %v537 = vunpack.c.l.b16 %v378
        %v538 = vunpack.c.l.b16 %v379
        %v539 = vunpack.c.l.b16 %v380
        %v540 = vunpack.c.l.b16 %v381
        %v541 = vunpack.c.l.b16 %v382
        %v542 = vunpack.c.l.b16 %v383
        %v543 = vunpack.c.l.b16 %v384
        %v544 = vunpack.c.l.b16 %v385
        %v545 = vunpack.c.l.b16 %v386
        %v546 = vunpack.c.l.b16 %v387
        %v547 = vunpack.c.l.b16 %v388
        %v548 = vunpack.c.l.b16 %v389
        %v549 = vunpack.c.l.b16 %v390
        %v550 = vunpack.c.l.b16 %v391
        %v551 = vunpack.c.l.b16 %v392
        %v552 = vunpack.c.l.b16 %v393
        %v553 = vunpack.c.l.b16 %v394
        %v554 = vunpack.c.l.b16 %v395
        %v555 = vunpack.c.l.b16 %v396
        %v556 = vunpack.c.l.b16 %v397
        %v557 = vunpack.c.l.b16 %v398
        %v558 = vunpack.c.l.b16 %v399
        %v559 = vunpack.c.l.b16 %v400
        %v560 = vpack.c.b16 %v529, %v528
        %v561 = vpack.c.b16 %v531, %v530
        %v562 = vpack.c.b16 %v533, %v532
        %v563 = vpack.c.b16 %v535, %v534
        %v564 = vpack.c.b16 %v537, %v536
        %v565 = vpack.c.b16 %v539, %v538
        %v566 = vpack.c.b16 %v541, %v540
        %v567 = vpack.c.b16 %v543, %v542
        %v568 = vpack.c.b16 %v545, %v544
        %v569 = vpack.c.b16 %v547, %v546
        %v570 = vpack.c.b16 %v549, %v548
        %v571 = vpack.c.b16 %v551, %v550
        %v572 = vpack.c.b16 %v553, %v552
        %v573 = vpack.c.b16 %v555, %v554
        %v574 = vpack.c.b16 %v557, %v556
        %v575 = vpack.c.b16 %v559, %v558
        %592 = vmatprep.subr.bf16.mxu0 0
        %593 = vmatpush1.bf16.msra.mxu0 %v560
        %594 = vmatprep.subr.bf16.mxu0 0
        %595 = vmatpush1.bf16.msra.mxu0 %v561
        %596 = vmatprep.subr.bf16.mxu0 0
        %597 = vmatpush1.bf16.msra.mxu0 %v562
        %598 = vmatprep.subr.bf16.mxu0 0
        %599 = vmatpush1.bf16.msra.mxu0 %v563
        %600 = vmatprep.subr.bf16.mxu0 0
        %601 = vmatpush1.bf16.msra.mxu0 %v564
        %602 = vmatprep.subr.bf16.mxu0 0
        %603 = vmatpush1.bf16.msra.mxu0 %v565
        %604 = vmatprep.subr.bf16.mxu0 0
        %605 = vmatpush1.bf16.msra.mxu0 %v566
        %606 = vmatprep.subr.bf16.mxu0 0
        %607 = vmatpush1.bf16.msra.mxu0 %v567
        %608 = vmatprep.subr.bf16.mxu0 0
        %609 = vmatpush1.bf16.msra.mxu0 %v568
        %610 = vmatprep.subr.bf16.mxu0 0
        %611 = vmatpush1.bf16.msra.mxu0 %v569
        %612 = vmatprep.subr.bf16.mxu0 0
        %613 = vmatpush1.bf16.msra.mxu0 %v570
        %614 = vmatprep.subr.bf16.mxu0 0
        %615 = vmatpush1.bf16.msra.mxu0 %v571
        %616 = vmatprep.subr.bf16.mxu0 0
        %617 = vmatpush1.bf16.msra.mxu0 %v572
        %618 = vmatprep.subr.bf16.mxu0 0
        %619 = vmatpush1.bf16.msra.mxu0 %v573
        %620 = vmatprep.subr.bf16.mxu0 0
        %621 = vmatpush1.bf16.msra.mxu0 %v574
        %622 = vmatprep.subr.bf16.mxu0 0
        %623 = vmatpush1.bf16.msra.mxu0 %v575
        %624 = vmatprep.mubr.bf16.mxu0 %v493
        %625 = vmatmul.mubr.bf16.gmra.mrb[0].mxu0 %v492
        %v626 = vpop.f32.mrb[0].mxu0
        %v627 = vadd.f32 0.0, %v626
        %v628 = vpop.f32.mrb[0].mxu0
        %v629 = vpop.f32.mrb[0].mxu0
        %v630 = vpop.f32.mrb[0].mxu0
        %631 = vdwg.mxu0
        %v632 = vrot.slane %v443, 7
        %v633 = vsel %vm458, %v632, %v441
        %v634 = vrot.slane %v445, 6
        %v635 = vsel %vm461, %v634, %v633
        %v636 = vrot.slane %v447, 5
        %v637 = vsel %vm464, %v636, %v635
        %v638 = vrot.slane %v449, 4
        %v639 = vsel %vm467, %v638, %v637
        %v640 = vrot.slane %v451, 3
        %v641 = vsel %vm470, %v640, %v639
        %v642 = vrot.slane %v453, 2
        %v643 = vsel %vm473, %v642, %v641
        %v644 = vrot.slane %v455, 1
        %v645 = vsel %vm476, %v644, %v643
        %v646 = vrot.slane %v444, 7
        %v647 = vsel %vm458, %v646, %v442
        %v648 = vrot.slane %v446, 6
        %v649 = vsel %vm461, %v648, %v647
        %v650 = vrot.slane %v448, 5
        %v651 = vsel %vm464, %v650, %v649
        %v652 = vrot.slane %v450, 4
        %v653 = vsel %vm467, %v652, %v651
        %v654 = vrot.slane %v452, 3
        %v655 = vsel %vm470, %v654, %v653
        %v656 = vrot.slane %v454, 2
        %v657 = vsel %vm473, %v656, %v655
        %v658 = vrot.slane %v456, 1
        %v659 = vsel %vm476, %v658, %v657
        %v660 = vpack.c.b16 %v645, %v645
        %v661 = vpack.c.b16 %v659, %v659
        %v696 = vunpack.c.l.b16 %v336
        %v697 = vunpack.c.l.b16 %v337
        %v698 = vunpack.c.l.b16 %v338
        %v699 = vunpack.c.l.b16 %v339
        %v700 = vunpack.c.l.b16 %v340
        %v701 = vunpack.c.l.b16 %v341
        %v702 = vunpack.c.l.b16 %v342
        %v703 = vunpack.c.l.b16 %v343
        %v704 = vunpack.c.l.b16 %v344
        %v705 = vunpack.c.l.b16 %v345
        %v706 = vunpack.c.l.b16 %v346
        %v707 = vunpack.c.l.b16 %v347
        %v708 = vunpack.c.l.b16 %v348
        %v709 = vunpack.c.l.b16 %v349
        %v710 = vunpack.c.l.b16 %v350
        %v711 = vunpack.c.l.b16 %v351
        %v712 = vunpack.c.l.b16 %v352
        %v713 = vunpack.c.l.b16 %v353
        %v714 = vunpack.c.l.b16 %v354
        %v715 = vunpack.c.l.b16 %v355
        %v716 = vunpack.c.l.b16 %v356
        %v717 = vunpack.c.l.b16 %v357
        %v718 = vunpack.c.l.b16 %v358
        %v719 = vunpack.c.l.b16 %v359
        %v720 = vunpack.c.l.b16 %v360
        %v721 = vunpack.c.l.b16 %v361
        %v722 = vunpack.c.l.b16 %v362
        %v723 = vunpack.c.l.b16 %v363
        %v724 = vunpack.c.l.b16 %v364
        %v725 = vunpack.c.l.b16 %v365
        %v726 = vunpack.c.l.b16 %v366
        %v727 = vunpack.c.l.b16 %v367
        %v728 = vpack.c.b16 %v697, %v696
        %v729 = vpack.c.b16 %v699, %v698
        %v730 = vpack.c.b16 %v701, %v700
        %v731 = vpack.c.b16 %v703, %v702
        %v732 = vpack.c.b16 %v705, %v704
        %v733 = vpack.c.b16 %v707, %v706
        %v734 = vpack.c.b16 %v709, %v708
        %v735 = vpack.c.b16 %v711, %v710
        %v736 = vpack.c.b16 %v713, %v712
        %v737 = vpack.c.b16 %v715, %v714
        %v738 = vpack.c.b16 %v717, %v716
        %v739 = vpack.c.b16 %v719, %v718
        %v740 = vpack.c.b16 %v721, %v720
        %v741 = vpack.c.b16 %v723, %v722
        %v742 = vpack.c.b16 %v725, %v724
        %v743 = vpack.c.b16 %v727, %v726
        %760 = vmatprep.subr.bf16.mxu0 0
        %761 = vmatpush1.bf16.msra.mxu0 %v728
        %762 = vmatprep.subr.bf16.mxu0 0
        %763 = vmatpush1.bf16.msra.mxu0 %v729
        %764 = vmatprep.subr.bf16.mxu0 0
        %765 = vmatpush1.bf16.msra.mxu0 %v730
        %766 = vmatprep.subr.bf16.mxu0 0
        %767 = vmatpush1.bf16.msra.mxu0 %v731
        %768 = vmatprep.subr.bf16.mxu0 0
        %769 = vmatpush1.bf16.msra.mxu0 %v732
        %770 = vmatprep.subr.bf16.mxu0 0
        %771 = vmatpush1.bf16.msra.mxu0 %v733
        %772 = vmatprep.subr.bf16.mxu0 0
        %773 = vmatpush1.bf16.msra.mxu0 %v734
        %774 = vmatprep.subr.bf16.mxu0 0
        %775 = vmatpush1.bf16.msra.mxu0 %v735
        %776 = vmatprep.subr.bf16.mxu0 0
        %777 = vmatpush1.bf16.msra.mxu0 %v736
        %778 = vmatprep.subr.bf16.mxu0 0
        %779 = vmatpush1.bf16.msra.mxu0 %v737
        %780 = vmatprep.subr.bf16.mxu0 0
        %781 = vmatpush1.bf16.msra.mxu0 %v738
        %782 = vmatprep.subr.bf16.mxu0 0
        %783 = vmatpush1.bf16.msra.mxu0 %v739
        %784 = vmatprep.subr.bf16.mxu0 0
        %785 = vmatpush1.bf16.msra.mxu0 %v740
        %786 = vmatprep.subr.bf16.mxu0 0
        %787 = vmatpush1.bf16.msra.mxu0 %v741
        %788 = vmatprep.subr.bf16.mxu0 0
        %789 = vmatpush1.bf16.msra.mxu0 %v742
        %790 = vmatprep.subr.bf16.mxu0 0
        %791 = vmatpush1.bf16.msra.mxu0 %v743
        %792 = vmatprep.mubr.bf16.mxu0 %v661
        %793 = vmatmul.mubr.bf16.gmra.mrb[0].mxu0 %v660
        %v794 = vpop.f32.mrb[0].mxu0
        %v795 = vadd.f32 %v627, %v794
        %v796 = vpop.f32.mrb[0].mxu0
        %v797 = vpop.f32.mrb[0].mxu0
        %v798 = vpop.f32.mrb[0].mxu0
        %799 = vdwg.mxu0
        %s800 = scalar_lea.vmem %s3, 256
        %v801 = vld [vmem:[%s800] sm:$0xf]
        %v802 = vld [vmem:[%s800 + $0x4] sm:$0xf]
        %v803 = vld [vmem:[%s800 + $0x8] sm:$0xf]
        %v804 = vld [vmem:[%s800 + $0xc] sm:$0xf]
        %v805 = vld [vmem:[%s800 + $0x10] sm:$0xf]
        %v806 = vld [vmem:[%s800 + $0x14] sm:$0xf]
        %v807 = vld [vmem:[%s800 + $0x18] sm:$0xf]
        %v808 = vld [vmem:[%s800 + $0x1c] sm:$0xf]
        %v809 = vld [vmem:[%s800 + $0x20] sm:$0xf]
        %v810 = vld [vmem:[%s800 + $0x24] sm:$0xf]
        %v811 = vld [vmem:[%s800 + $0x28] sm:$0xf]
        %v812 = vld [vmem:[%s800 + $0x2c] sm:$0xf]
        %v813 = vld [vmem:[%s800 + $0x30] sm:$0xf]
        %v814 = vld [vmem:[%s800 + $0x34] sm:$0xf]
        %v815 = vld [vmem:[%s800 + $0x38] sm:$0xf]
        %v816 = vld [vmem:[%s800 + $0x3c] sm:$0xf]
        %v817 = vld [vmem:[%s800 + $0x40] sm:$0xf]
        %v818 = vld [vmem:[%s800 + $0x44] sm:$0xf]
        %v819 = vld [vmem:[%s800 + $0x48] sm:$0xf]
        %v820 = vld [vmem:[%s800 + $0x4c] sm:$0xf]
        %v821 = vld [vmem:[%s800 + $0x50] sm:$0xf]
        %v822 = vld [vmem:[%s800 + $0x54] sm:$0xf]
        %v823 = vld [vmem:[%s800 + $0x58] sm:$0xf]
        %v824 = vld [vmem:[%s800 + $0x5c] sm:$0xf]
        %v825 = vld [vmem:[%s800 + $0x60] sm:$0xf]
        %v826 = vld [vmem:[%s800 + $0x64] sm:$0xf]
        %v827 = vld [vmem:[%s800 + $0x68] sm:$0xf]
        %v828 = vld [vmem:[%s800 + $0x6c] sm:$0xf]
        %v829 = vld [vmem:[%s800 + $0x70] sm:$0xf]
        %v830 = vld [vmem:[%s800 + $0x74] sm:$0xf]
        %v831 = vld [vmem:[%s800 + $0x78] sm:$0xf]
        %v832 = vld [vmem:[%s800 + $0x7c] sm:$0xf]
        %v833 = vrot.slane %v441, 2
        %v834 = vrot.slane %v443, 1
        %v835 = vsel %vm458, %v834, %v833
        %v836 = vsel %vm461, %v445, %v835
        %v837 = vrot.slane %v447, 7
        %v838 = vsel %vm464, %v837, %v836
        %v839 = vrot.slane %v449, 6
        %v840 = vsel %vm467, %v839, %v838
        %v841 = vrot.slane %v451, 5
        %v842 = vsel %vm470, %v841, %v840
        %v843 = vrot.slane %v453, 4
        %v844 = vsel %vm473, %v843, %v842
        %v845 = vrot.slane %v455, 3
        %v846 = vsel %vm476, %v845, %v844
        %v847 = vrot.slane %v442, 2
        %v848 = vrot.slane %v444, 1
        %v849 = vsel %vm458, %v848, %v847
        %v850 = vsel %vm461, %v446, %v849
        %v851 = vrot.slane %v448, 7
        %v852 = vsel %vm464, %v851, %v850
        %v853 = vrot.slane %v450, 6
        %v854 = vsel %vm467, %v853, %v852
        %v855 = vrot.slane %v452, 5
        %v856 = vsel %vm470, %v855, %v854
        %v857 = vrot.slane %v454, 4
        %v858 = vsel %vm473, %v857, %v856
        %v859 = vrot.slane %v456, 3
        %v860 = vsel %vm476, %v859, %v858
        %v861 = vpack.c.b16 %v846, %v846
        %v862 = vpack.c.b16 %v860, %v860
        %v897 = vunpack.c.l.b16 %v801
        %v898 = vunpack.c.l.b16 %v802
        %v899 = vunpack.c.l.b16 %v803
        %v900 = vunpack.c.l.b16 %v804
        %v901 = vunpack.c.l.b16 %v805
        %v902 = vunpack.c.l.b16 %v806
        %v903 = vunpack.c.l.b16 %v807
        %v904 = vunpack.c.l.b16 %v808
        %v905 = vunpack.c.l.b16 %v809
        %v906 = vunpack.c.l.b16 %v810
        %v907 = vunpack.c.l.b16 %v811
        %v908 = vunpack.c.l.b16 %v812
        %v909 = vunpack.c.l.b16 %v813
        %v910 = vunpack.c.l.b16 %v814
        %v911 = vunpack.c.l.b16 %v815
        %v912 = vunpack.c.l.b16 %v816
        %v913 = vunpack.c.l.b16 %v817
        %v914 = vunpack.c.l.b16 %v818
        %v915 = vunpack.c.l.b16 %v819
        %v916 = vunpack.c.l.b16 %v820
        %v917 = vunpack.c.l.b16 %v821
        %v918 = vunpack.c.l.b16 %v822
        %v919 = vunpack.c.l.b16 %v823
        %v920 = vunpack.c.l.b16 %v824
        %v921 = vunpack.c.l.b16 %v825
        %v922 = vunpack.c.l.b16 %v826
        %v923 = vunpack.c.l.b16 %v827
        %v924 = vunpack.c.l.b16 %v828
        %v925 = vunpack.c.l.b16 %v829
        %v926 = vunpack.c.l.b16 %v830
        %v927 = vunpack.c.l.b16 %v831
        %v928 = vunpack.c.l.b16 %v832
        %v929 = vpack.c.b16 %v898, %v897
        %v930 = vpack.c.b16 %v900, %v899
        %v931 = vpack.c.b16 %v902, %v901
        %v932 = vpack.c.b16 %v904, %v903
        %v933 = vpack.c.b16 %v906, %v905
        %v934 = vpack.c.b16 %v908, %v907
        %v935 = vpack.c.b16 %v910, %v909
        %v936 = vpack.c.b16 %v912, %v911
        %v937 = vpack.c.b16 %v914, %v913
        %v938 = vpack.c.b16 %v916, %v915
        %v939 = vpack.c.b16 %v918, %v917
        %v940 = vpack.c.b16 %v920, %v919
        %v941 = vpack.c.b16 %v922, %v921
        %v942 = vpack.c.b16 %v924, %v923
        %v943 = vpack.c.b16 %v926, %v925
        %v944 = vpack.c.b16 %v928, %v927
        %961 = vmatprep.subr.bf16.mxu0 0
        %962 = vmatpush1.bf16.msra.mxu0 %v929
        %963 = vmatprep.subr.bf16.mxu0 0
        %964 = vmatpush1.bf16.msra.mxu0 %v930
        %965 = vmatprep.subr.bf16.mxu0 0
        %966 = vmatpush1.bf16.msra.mxu0 %v931
        %967 = vmatprep.subr.bf16.mxu0 0
        %968 = vmatpush1.bf16.msra.mxu0 %v932
        %969 = vmatprep.subr.bf16.mxu0 0
        %970 = vmatpush1.bf16.msra.mxu0 %v933
        %971 = vmatprep.subr.bf16.mxu0 0
        %972 = vmatpush1.bf16.msra.mxu0 %v934
        %973 = vmatprep.subr.bf16.mxu0 0
        %974 = vmatpush1.bf16.msra.mxu0 %v935
        %975 = vmatprep.subr.bf16.mxu0 0
        %976 = vmatpush1.bf16.msra.mxu0 %v936
        %977 = vmatprep.subr.bf16.mxu0 0
        %978 = vmatpush1.bf16.msra.mxu0 %v937
        %979 = vmatprep.subr.bf16.mxu0 0
        %980 = vmatpush1.bf16.msra.mxu0 %v938
        %981 = vmatprep.subr.bf16.mxu0 0
        %982 = vmatpush1.bf16.msra.mxu0 %v939
        %983 = vmatprep.subr.bf16.mxu0 0
        %984 = vmatpush1.bf16.msra.mxu0 %v940
        %985 = vmatprep.subr.bf16.mxu0 0
        %986 = vmatpush1.bf16.msra.mxu0 %v941
        %987 = vmatprep.subr.bf16.mxu0 0
        %988 = vmatpush1.bf16.msra.mxu0 %v942
        %989 = vmatprep.subr.bf16.mxu0 0
        %990 = vmatpush1.bf16.msra.mxu0 %v943
        %991 = vmatprep.subr.bf16.mxu0 0
        %992 = vmatpush1.bf16.msra.mxu0 %v944
        %993 = vmatprep.mubr.bf16.mxu0 %v862
        %994 = vmatmul.mubr.bf16.gmra.mrb[0].mxu0 %v861
        %v995 = vpop.f32.mrb[0].mxu0
        %v996 = vadd.f32 0.0, %v995
        %v997 = vpop.f32.mrb[0].mxu0
        %v998 = vpop.f32.mrb[0].mxu0
        %v999 = vpop.f32.mrb[0].mxu0
        %1000 = vdwg.mxu0
        %v1001 = vadd.f32 %v795, %v996
        %s1002 = scalar_lea.vmem %s3, 384
        %v1003 = vld [vmem:[%s1002] sm:$0xf]
        %v1004 = vld [vmem:[%s1002 + $0x4] sm:$0xf]
        %v1005 = vld [vmem:[%s1002 + $0x8] sm:$0xf]
        %v1006 = vld [vmem:[%s1002 + $0xc] sm:$0xf]
        %v1007 = vld [vmem:[%s1002 + $0x10] sm:$0xf]
        %v1008 = vld [vmem:[%s1002 + $0x14] sm:$0xf]
        %v1009 = vld [vmem:[%s1002 + $0x18] sm:$0xf]
        %v1010 = vld [vmem:[%s1002 + $0x1c] sm:$0xf]
        %v1011 = vld [vmem:[%s1002 + $0x20] sm:$0xf]
        %v1012 = vld [vmem:[%s1002 + $0x24] sm:$0xf]
        %v1013 = vld [vmem:[%s1002 + $0x28] sm:$0xf]
        %v1014 = vld [vmem:[%s1002 + $0x2c] sm:$0xf]
        %v1015 = vld [vmem:[%s1002 + $0x30] sm:$0xf]
        %v1016 = vld [vmem:[%s1002 + $0x34] sm:$0xf]
        %v1017 = vld [vmem:[%s1002 + $0x38] sm:$0xf]
        %v1018 = vld [vmem:[%s1002 + $0x3c] sm:$0xf]
        %v1019 = vld [vmem:[%s1002 + $0x40] sm:$0xf]
        %v1020 = vld [vmem:[%s1002 + $0x44] sm:$0xf]
        %v1021 = vld [vmem:[%s1002 + $0x48] sm:$0xf]
        %v1022 = vld [vmem:[%s1002 + $0x4c] sm:$0xf]
        %v1023 = vld [vmem:[%s1002 + $0x50] sm:$0xf]
        %v1024 = vld [vmem:[%s1002 + $0x54] sm:$0xf]
        %v1025 = vld [vmem:[%s1002 + $0x58] sm:$0xf]
        %v1026 = vld [vmem:[%s1002 + $0x5c] sm:$0xf]
        %v1027 = vld [vmem:[%s1002 + $0x60] sm:$0xf]
        %v1028 = vld [vmem:[%s1002 + $0x64] sm:$0xf]
        %v1029 = vld [vmem:[%s1002 + $0x68] sm:$0xf]
        %v1030 = vld [vmem:[%s1002 + $0x6c] sm:$0xf]
        %v1031 = vld [vmem:[%s1002 + $0x70] sm:$0xf]
        %v1032 = vld [vmem:[%s1002 + $0x74] sm:$0xf]
        %v1033 = vld [vmem:[%s1002 + $0x78] sm:$0xf]
        %v1034 = vld [vmem:[%s1002 + $0x7c] sm:$0xf]
        %v1035 = vrot.slane %v441, 3
        %v1036 = vrot.slane %v443, 2
        %v1037 = vsel %vm458, %v1036, %v1035
        %v1038 = vrot.slane %v445, 1
        %v1039 = vsel %vm461, %v1038, %v1037
        %v1040 = vsel %vm464, %v447, %v1039
        %v1041 = vrot.slane %v449, 7
        %v1042 = vsel %vm467, %v1041, %v1040
        %v1043 = vrot.slane %v451, 6
        %v1044 = vsel %vm470, %v1043, %v1042
        %v1045 = vrot.slane %v453, 5
        %v1046 = vsel %vm473, %v1045, %v1044
        %v1047 = vrot.slane %v455, 4
        %v1048 = vsel %vm476, %v1047, %v1046
        %v1049 = vrot.slane %v442, 3
        %v1050 = vrot.slane %v444, 2
        %v1051 = vsel %vm458, %v1050, %v1049
        %v1052 = vrot.slane %v446, 1
        %v1053 = vsel %vm461, %v1052, %v1051
        %v1054 = vsel %vm464, %v448, %v1053
        %v1055 = vrot.slane %v450, 7
        %v1056 = vsel %vm467, %v1055, %v1054
        %v1057 = vrot.slane %v452, 6
        %v1058 = vsel %vm470, %v1057, %v1056
        %v1059 = vrot.slane %v454, 5
        %v1060 = vsel %vm473, %v1059, %v1058
        %v1061 = vrot.slane %v456, 4
        %v1062 = vsel %vm476, %v1061, %v1060
        %v1063 = vpack.c.b16 %v1048, %v1048
        %v1064 = vpack.c.b16 %v1062, %v1062
        %v1099 = vunpack.c.l.b16 %v1003
        %v1100 = vunpack.c.l.b16 %v1004
        %v1101 = vunpack.c.l.b16 %v1005
        %v1102 = vunpack.c.l.b16 %v1006
        %v1103 = vunpack.c.l.b16 %v1007
        %v1104 = vunpack.c.l.b16 %v1008
        %v1105 = vunpack.c.l.b16 %v1009
        %v1106 = vunpack.c.l.b16 %v1010
        %v1107 = vunpack.c.l.b16 %v1011
        %v1108 = vunpack.c.l.b16 %v1012
        %v1109 = vunpack.c.l.b16 %v1013
        %v1110 = vunpack.c.l.b16 %v1014
        %v1111 = vunpack.c.l.b16 %v1015
        %v1112 = vunpack.c.l.b16 %v1016
        %v1113 = vunpack.c.l.b16 %v1017
        %v1114 = vunpack.c.l.b16 %v1018
        %v1115 = vunpack.c.l.b16 %v1019
        %v1116 = vunpack.c.l.b16 %v1020
        %v1117 = vunpack.c.l.b16 %v1021
        %v1118 = vunpack.c.l.b16 %v1022
        %v1119 = vunpack.c.l.b16 %v1023
        %v1120 = vunpack.c.l.b16 %v1024
        %v1121 = vunpack.c.l.b16 %v1025
        %v1122 = vunpack.c.l.b16 %v1026
        %v1123 = vunpack.c.l.b16 %v1027
        %v1124 = vunpack.c.l.b16 %v1028
        %v1125 = vunpack.c.l.b16 %v1029
        %v1126 = vunpack.c.l.b16 %v1030
        %v1127 = vunpack.c.l.b16 %v1031
        %v1128 = vunpack.c.l.b16 %v1032
        %v1129 = vunpack.c.l.b16 %v1033
        %v1130 = vunpack.c.l.b16 %v1034
        %v1131 = vpack.c.b16 %v1100, %v1099
        %v1132 = vpack.c.b16 %v1102, %v1101
        %v1133 = vpack.c.b16 %v1104, %v1103
        %v1134 = vpack.c.b16 %v1106, %v1105
        %v1135 = vpack.c.b16 %v1108, %v1107
        %v1136 = vpack.c.b16 %v1110, %v1109
        %v1137 = vpack.c.b16 %v1112, %v1111
        %v1138 = vpack.c.b16 %v1114, %v1113
        %v1139 = vpack.c.b16 %v1116, %v1115
        %v1140 = vpack.c.b16 %v1118, %v1117
        %v1141 = vpack.c.b16 %v1120, %v1119
        %v1142 = vpack.c.b16 %v1122, %v1121
        %v1143 = vpack.c.b16 %v1124, %v1123
        %v1144 = vpack.c.b16 %v1126, %v1125
        %v1145 = vpack.c.b16 %v1128, %v1127
        %v1146 = vpack.c.b16 %v1130, %v1129
        %1163 = vmatprep.subr.bf16.mxu0 0
        %1164 = vmatpush1.bf16.msra.mxu0 %v1131
        %1165 = vmatprep.subr.bf16.mxu0 0
        %1166 = vmatpush1.bf16.msra.mxu0 %v1132
        %1167 = vmatprep.subr.bf16.mxu0 0
        %1168 = vmatpush1.bf16.msra.mxu0 %v1133
        %1169 = vmatprep.subr.bf16.mxu0 0
        %1170 = vmatpush1.bf16.msra.mxu0 %v1134
        %1171 = vmatprep.subr.bf16.mxu0 0
        %1172 = vmatpush1.bf16.msra.mxu0 %v1135
        %1173 = vmatprep.subr.bf16.mxu0 0
        %1174 = vmatpush1.bf16.msra.mxu0 %v1136
        %1175 = vmatprep.subr.bf16.mxu0 0
        %1176 = vmatpush1.bf16.msra.mxu0 %v1137
        %1177 = vmatprep.subr.bf16.mxu0 0
        %1178 = vmatpush1.bf16.msra.mxu0 %v1138
        %1179 = vmatprep.subr.bf16.mxu0 0
        %1180 = vmatpush1.bf16.msra.mxu0 %v1139
        %1181 = vmatprep.subr.bf16.mxu0 0
        %1182 = vmatpush1.bf16.msra.mxu0 %v1140
        %1183 = vmatprep.subr.bf16.mxu0 0
        %1184 = vmatpush1.bf16.msra.mxu0 %v1141
        %1185 = vmatprep.subr.bf16.mxu0 0
        %1186 = vmatpush1.bf16.msra.mxu0 %v1142
        %1187 = vmatprep.subr.bf16.mxu0 0
        %1188 = vmatpush1.bf16.msra.mxu0 %v1143
        %1189 = vmatprep.subr.bf16.mxu0 0
        %1190 = vmatpush1.bf16.msra.mxu0 %v1144
        %1191 = vmatprep.subr.bf16.mxu0 0
        %1192 = vmatpush1.bf16.msra.mxu0 %v1145
        %1193 = vmatprep.subr.bf16.mxu0 0
        %1194 = vmatpush1.bf16.msra.mxu0 %v1146
        %1195 = vmatprep.mubr.bf16.mxu0 %v1064
        %1196 = vmatmul.mubr.bf16.gmra.mrb[0].mxu0 %v1063
        %v1197 = vpop.f32.mrb[0].mxu0
        %v1198 = vadd.f32 0.0, %v1197
        %v1199 = vpop.f32.mrb[0].mxu0
        %v1200 = vpop.f32.mrb[0].mxu0
        %v1201 = vpop.f32.mrb[0].mxu0
        %1202 = vdwg.mxu0
        %v1203 = vadd.f32 %v1001, %v1198
        %s1204 = scalar_lea.vmem %s3, 512
        %v1205 = vld [vmem:[%s1204] sm:$0xf]
        %v1206 = vld [vmem:[%s1204 + $0x4] sm:$0xf]
        %v1207 = vld [vmem:[%s1204 + $0x8] sm:$0xf]
        %v1208 = vld [vmem:[%s1204 + $0xc] sm:$0xf]
        %v1209 = vld [vmem:[%s1204 + $0x10] sm:$0xf]
        %v1210 = vld [vmem:[%s1204 + $0x14] sm:$0xf]
        %v1211 = vld [vmem:[%s1204 + $0x18] sm:$0xf]
        %v1212 = vld [vmem:[%s1204 + $0x1c] sm:$0xf]
        %v1213 = vld [vmem:[%s1204 + $0x20] sm:$0xf]
        %v1214 = vld [vmem:[%s1204 + $0x24] sm:$0xf]
        %v1215 = vld [vmem:[%s1204 + $0x28] sm:$0xf]
        %v1216 = vld [vmem:[%s1204 + $0x2c] sm:$0xf]
        %v1217 = vld [vmem:[%s1204 + $0x30] sm:$0xf]
        %v1218 = vld [vmem:[%s1204 + $0x34] sm:$0xf]
        %v1219 = vld [vmem:[%s1204 + $0x38] sm:$0xf]
        %v1220 = vld [vmem:[%s1204 + $0x3c] sm:$0xf]
        %v1221 = vld [vmem:[%s1204 + $0x40] sm:$0xf]
        %v1222 = vld [vmem:[%s1204 + $0x44] sm:$0xf]
        %v1223 = vld [vmem:[%s1204 + $0x48] sm:$0xf]
        %v1224 = vld [vmem:[%s1204 + $0x4c] sm:$0xf]
        %v1225 = vld [vmem:[%s1204 + $0x50] sm:$0xf]
        %v1226 = vld [vmem:[%s1204 + $0x54] sm:$0xf]
        %v1227 = vld [vmem:[%s1204 + $0x58] sm:$0xf]
        %v1228 = vld [vmem:[%s1204 + $0x5c] sm:$0xf]
        %v1229 = vld [vmem:[%s1204 + $0x60] sm:$0xf]
        %v1230 = vld [vmem:[%s1204 + $0x64] sm:$0xf]
        %v1231 = vld [vmem:[%s1204 + $0x68] sm:$0xf]
        %v1232 = vld [vmem:[%s1204 + $0x6c] sm:$0xf]
        %v1233 = vld [vmem:[%s1204 + $0x70] sm:$0xf]
        %v1234 = vld [vmem:[%s1204 + $0x74] sm:$0xf]
        %v1235 = vld [vmem:[%s1204 + $0x78] sm:$0xf]
        %v1236 = vld [vmem:[%s1204 + $0x7c] sm:$0xf]
        %v1237 = vrot.slane %v441, 4
        %v1238 = vrot.slane %v443, 3
        %v1239 = vsel %vm458, %v1238, %v1237
        %v1240 = vrot.slane %v445, 2
        %v1241 = vsel %vm461, %v1240, %v1239
        %v1242 = vrot.slane %v447, 1
        %v1243 = vsel %vm464, %v1242, %v1241
        %v1244 = vsel %vm467, %v449, %v1243
        %v1245 = vrot.slane %v451, 7
        %v1246 = vsel %vm470, %v1245, %v1244
        %v1247 = vrot.slane %v453, 6
        %v1248 = vsel %vm473, %v1247, %v1246
        %v1249 = vrot.slane %v455, 5
        %v1250 = vsel %vm476, %v1249, %v1248
        %v1251 = vrot.slane %v442, 4
        %v1252 = vrot.slane %v444, 3
        %v1253 = vsel %vm458, %v1252, %v1251
        %v1254 = vrot.slane %v446, 2
        %v1255 = vsel %vm461, %v1254, %v1253
        %v1256 = vrot.slane %v448, 1
        %v1257 = vsel %vm464, %v1256, %v1255
        %v1258 = vsel %vm467, %v450, %v1257
        %v1259 = vrot.slane %v452, 7
        %v1260 = vsel %vm470, %v1259, %v1258
        %v1261 = vrot.slane %v454, 6
        %v1262 = vsel %vm473, %v1261, %v1260
        %v1263 = vrot.slane %v456, 5
        %v1264 = vsel %vm476, %v1263, %v1262
        %v1265 = vpack.c.b16 %v1250, %v1250
        %v1266 = vpack.c.b16 %v1264, %v1264
        %v1301 = vunpack.c.l.b16 %v1205
        %v1302 = vunpack.c.l.b16 %v1206
        %v1303 = vunpack.c.l.b16 %v1207
        %v1304 = vunpack.c.l.b16 %v1208
        %v1305 = vunpack.c.l.b16 %v1209
        %v1306 = vunpack.c.l.b16 %v1210
        %v1307 = vunpack.c.l.b16 %v1211
        %v1308 = vunpack.c.l.b16 %v1212
        %v1309 = vunpack.c.l.b16 %v1213
        %v1310 = vunpack.c.l.b16 %v1214
        %v1311 = vunpack.c.l.b16 %v1215
        %v1312 = vunpack.c.l.b16 %v1216
        %v1313 = vunpack.c.l.b16 %v1217
        %v1314 = vunpack.c.l.b16 %v1218
        %v1315 = vunpack.c.l.b16 %v1219
        %v1316 = vunpack.c.l.b16 %v1220
        %v1317 = vunpack.c.l.b16 %v1221
        %v1318 = vunpack.c.l.b16 %v1222
        %v1319 = vunpack.c.l.b16 %v1223
        %v1320 = vunpack.c.l.b16 %v1224
        %v1321 = vunpack.c.l.b16 %v1225
        %v1322 = vunpack.c.l.b16 %v1226
        %v1323 = vunpack.c.l.b16 %v1227
        %v1324 = vunpack.c.l.b16 %v1228
        %v1325 = vunpack.c.l.b16 %v1229
        %v1326 = vunpack.c.l.b16 %v1230
        %v1327 = vunpack.c.l.b16 %v1231
        %v1328 = vunpack.c.l.b16 %v1232
        %v1329 = vunpack.c.l.b16 %v1233
        %v1330 = vunpack.c.l.b16 %v1234
        %v1331 = vunpack.c.l.b16 %v1235
        %v1332 = vunpack.c.l.b16 %v1236
        %v1333 = vpack.c.b16 %v1302, %v1301
        %v1334 = vpack.c.b16 %v1304, %v1303
        %v1335 = vpack.c.b16 %v1306, %v1305
        %v1336 = vpack.c.b16 %v1308, %v1307
        %v1337 = vpack.c.b16 %v1310, %v1309
        %v1338 = vpack.c.b16 %v1312, %v1311
        %v1339 = vpack.c.b16 %v1314, %v1313
        %v1340 = vpack.c.b16 %v1316, %v1315
        %v1341 = vpack.c.b16 %v1318, %v1317
        %v1342 = vpack.c.b16 %v1320, %v1319
        %v1343 = vpack.c.b16 %v1322, %v1321
        %v1344 = vpack.c.b16 %v1324, %v1323
        %v1345 = vpack.c.b16 %v1326, %v1325
        %v1346 = vpack.c.b16 %v1328, %v1327
        %v1347 = vpack.c.b16 %v1330, %v1329
        %v1348 = vpack.c.b16 %v1332, %v1331
        %1365 = vmatprep.subr.bf16.mxu0 0
        %1366 = vmatpush1.bf16.msra.mxu0 %v1333
        %1367 = vmatprep.subr.bf16.mxu0 0
        %1368 = vmatpush1.bf16.msra.mxu0 %v1334
        %1369 = vmatprep.subr.bf16.mxu0 0
        %1370 = vmatpush1.bf16.msra.mxu0 %v1335
        %1371 = vmatprep.subr.bf16.mxu0 0
        %1372 = vmatpush1.bf16.msra.mxu0 %v1336
        %1373 = vmatprep.subr.bf16.mxu0 0
        %1374 = vmatpush1.bf16.msra.mxu0 %v1337
        %1375 = vmatprep.subr.bf16.mxu0 0
        %1376 = vmatpush1.bf16.msra.mxu0 %v1338
        %1377 = vmatprep.subr.bf16.mxu0 0
        %1378 = vmatpush1.bf16.msra.mxu0 %v1339
        %1379 = vmatprep.subr.bf16.mxu0 0
        %1380 = vmatpush1.bf16.msra.mxu0 %v1340
        %1381 = vmatprep.subr.bf16.mxu0 0
        %1382 = vmatpush1.bf16.msra.mxu0 %v1341
        %1383 = vmatprep.subr.bf16.mxu0 0
        %1384 = vmatpush1.bf16.msra.mxu0 %v1342
        %1385 = vmatprep.subr.bf16.mxu0 0
        %1386 = vmatpush1.bf16.msra.mxu0 %v1343
        %1387 = vmatprep.subr.bf16.mxu0 0
        %1388 = vmatpush1.bf16.msra.mxu0 %v1344
        %1389 = vmatprep.subr.bf16.mxu0 0
        %1390 = vmatpush1.bf16.msra.mxu0 %v1345
        %1391 = vmatprep.subr.bf16.mxu0 0
        %1392 = vmatpush1.bf16.msra.mxu0 %v1346
        %1393 = vmatprep.subr.bf16.mxu0 0
        %1394 = vmatpush1.bf16.msra.mxu0 %v1347
        %1395 = vmatprep.subr.bf16.mxu0 0
        %1396 = vmatpush1.bf16.msra.mxu0 %v1348
        %1397 = vmatprep.mubr.bf16.mxu0 %v1266
        %1398 = vmatmul.mubr.bf16.gmra.mrb[0].mxu0 %v1265
        %v1399 = vpop.f32.mrb[0].mxu0
        %v1400 = vadd.f32 0.0, %v1399
        %v1401 = vpop.f32.mrb[0].mxu0
        %v1402 = vpop.f32.mrb[0].mxu0
        %v1403 = vpop.f32.mrb[0].mxu0
        %1404 = vdwg.mxu0
        %v1405 = vadd.f32 %v1203, %v1400
        %s1406 = scalar_lea.vmem %s3, 640
        %v1407 = vld [vmem:[%s1406] sm:$0xf]
        %v1408 = vld [vmem:[%s1406 + $0x4] sm:$0xf]
        %v1409 = vld [vmem:[%s1406 + $0x8] sm:$0xf]
        %v1410 = vld [vmem:[%s1406 + $0xc] sm:$0xf]
        %v1411 = vld [vmem:[%s1406 + $0x10] sm:$0xf]
        %v1412 = vld [vmem:[%s1406 + $0x14] sm:$0xf]
        %v1413 = vld [vmem:[%s1406 + $0x18] sm:$0xf]
        %v1414 = vld [vmem:[%s1406 + $0x1c] sm:$0xf]
        %v1415 = vld [vmem:[%s1406 + $0x20] sm:$0xf]
        %v1416 = vld [vmem:[%s1406 + $0x24] sm:$0xf]
        %v1417 = vld [vmem:[%s1406 + $0x28] sm:$0xf]
        %v1418 = vld [vmem:[%s1406 + $0x2c] sm:$0xf]
        %v1419 = vld [vmem:[%s1406 + $0x30] sm:$0xf]
        %v1420 = vld [vmem:[%s1406 + $0x34] sm:$0xf]
        %v1421 = vld [vmem:[%s1406 + $0x38] sm:$0xf]
        %v1422 = vld [vmem:[%s1406 + $0x3c] sm:$0xf]
        %v1423 = vld [vmem:[%s1406 + $0x40] sm:$0xf]
        %v1424 = vld [vmem:[%s1406 + $0x44] sm:$0xf]
        %v1425 = vld [vmem:[%s1406 + $0x48] sm:$0xf]
        %v1426 = vld [vmem:[%s1406 + $0x4c] sm:$0xf]
        %v1427 = vld [vmem:[%s1406 + $0x50] sm:$0xf]
        %v1428 = vld [vmem:[%s1406 + $0x54] sm:$0xf]
        %v1429 = vld [vmem:[%s1406 + $0x58] sm:$0xf]
        %v1430 = vld [vmem:[%s1406 + $0x5c] sm:$0xf]
        %v1431 = vld [vmem:[%s1406 + $0x60] sm:$0xf]
        %v1432 = vld [vmem:[%s1406 + $0x64] sm:$0xf]
        %v1433 = vld [vmem:[%s1406 + $0x68] sm:$0xf]
        %v1434 = vld [vmem:[%s1406 + $0x6c] sm:$0xf]
        %v1435 = vld [vmem:[%s1406 + $0x70] sm:$0xf]
        %v1436 = vld [vmem:[%s1406 + $0x74] sm:$0xf]
        %v1437 = vld [vmem:[%s1406 + $0x78] sm:$0xf]
        %v1438 = vld [vmem:[%s1406 + $0x7c] sm:$0xf]
        %v1439 = vrot.slane %v441, 5
        %v1440 = vrot.slane %v443, 4
        %v1441 = vsel %vm458, %v1440, %v1439
        %v1442 = vrot.slane %v445, 3
        %v1443 = vsel %vm461, %v1442, %v1441
        %v1444 = vrot.slane %v447, 2
        %v1445 = vsel %vm464, %v1444, %v1443
        %v1446 = vrot.slane %v449, 1
        %v1447 = vsel %vm467, %v1446, %v1445
        %v1448 = vsel %vm470, %v451, %v1447
        %v1449 = vrot.slane %v453, 7
        %v1450 = vsel %vm473, %v1449, %v1448
        %v1451 = vrot.slane %v455, 6
        %v1452 = vsel %vm476, %v1451, %v1450
        %v1453 = vrot.slane %v442, 5
        %v1454 = vrot.slane %v444, 4
        %v1455 = vsel %vm458, %v1454, %v1453
        %v1456 = vrot.slane %v446, 3
        %v1457 = vsel %vm461, %v1456, %v1455
        %v1458 = vrot.slane %v448, 2
        %v1459 = vsel %vm464, %v1458, %v1457
        %v1460 = vrot.slane %v450, 1
        %v1461 = vsel %vm467, %v1460, %v1459
        %v1462 = vsel %vm470, %v452, %v1461
        %v1463 = vrot.slane %v454, 7
        %v1464 = vsel %vm473, %v1463, %v1462
        %v1465 = vrot.slane %v456, 6
        %v1466 = vsel %vm476, %v1465, %v1464
        %v1467 = vpack.c.b16 %v1452, %v1452
        %v1468 = vpack.c.b16 %v1466, %v1466
        %v1503 = vunpack.c.l.b16 %v1407
        %v1504 = vunpack.c.l.b16 %v1408
        %v1505 = vunpack.c.l.b16 %v1409
        %v1506 = vunpack.c.l.b16 %v1410
        %v1507 = vunpack.c.l.b16 %v1411
        %v1508 = vunpack.c.l.b16 %v1412
        %v1509 = vunpack.c.l.b16 %v1413
        %v1510 = vunpack.c.l.b16 %v1414
        %v1511 = vunpack.c.l.b16 %v1415
        %v1512 = vunpack.c.l.b16 %v1416
        %v1513 = vunpack.c.l.b16 %v1417
        %v1514 = vunpack.c.l.b16 %v1418
        %v1515 = vunpack.c.l.b16 %v1419
        %v1516 = vunpack.c.l.b16 %v1420
        %v1517 = vunpack.c.l.b16 %v1421
        %v1518 = vunpack.c.l.b16 %v1422
        %v1519 = vunpack.c.l.b16 %v1423
        %v1520 = vunpack.c.l.b16 %v1424
        %v1521 = vunpack.c.l.b16 %v1425
        %v1522 = vunpack.c.l.b16 %v1426
        %v1523 = vunpack.c.l.b16 %v1427
        %v1524 = vunpack.c.l.b16 %v1428
        %v1525 = vunpack.c.l.b16 %v1429
        %v1526 = vunpack.c.l.b16 %v1430
        %v1527 = vunpack.c.l.b16 %v1431
        %v1528 = vunpack.c.l.b16 %v1432
        %v1529 = vunpack.c.l.b16 %v1433
        %v1530 = vunpack.c.l.b16 %v1434
        %v1531 = vunpack.c.l.b16 %v1435
        %v1532 = vunpack.c.l.b16 %v1436
        %v1533 = vunpack.c.l.b16 %v1437
        %v1534 = vunpack.c.l.b16 %v1438
        %v1535 = vpack.c.b16 %v1504, %v1503
        %v1536 = vpack.c.b16 %v1506, %v1505
        %v1537 = vpack.c.b16 %v1508, %v1507
        %v1538 = vpack.c.b16 %v1510, %v1509
        %v1539 = vpack.c.b16 %v1512, %v1511
        %v1540 = vpack.c.b16 %v1514, %v1513
        %v1541 = vpack.c.b16 %v1516, %v1515
        %v1542 = vpack.c.b16 %v1518, %v1517
        %v1543 = vpack.c.b16 %v1520, %v1519
        %v1544 = vpack.c.b16 %v1522, %v1521
        %v1545 = vpack.c.b16 %v1524, %v1523
        %v1546 = vpack.c.b16 %v1526, %v1525
        %v1547 = vpack.c.b16 %v1528, %v1527
        %v1548 = vpack.c.b16 %v1530, %v1529
        %v1549 = vpack.c.b16 %v1532, %v1531
        %v1550 = vpack.c.b16 %v1534, %v1533
        %1567 = vmatprep.subr.bf16.mxu0 0
        %1568 = vmatpush1.bf16.msra.mxu0 %v1535
        %1569 = vmatprep.subr.bf16.mxu0 0
        %1570 = vmatpush1.bf16.msra.mxu0 %v1536
        %1571 = vmatprep.subr.bf16.mxu0 0
        %1572 = vmatpush1.bf16.msra.mxu0 %v1537
        %1573 = vmatprep.subr.bf16.mxu0 0
        %1574 = vmatpush1.bf16.msra.mxu0 %v1538
        %1575 = vmatprep.subr.bf16.mxu0 0
        %1576 = vmatpush1.bf16.msra.mxu0 %v1539
        %1577 = vmatprep.subr.bf16.mxu0 0
        %1578 = vmatpush1.bf16.msra.mxu0 %v1540
        %1579 = vmatprep.subr.bf16.mxu0 0
        %1580 = vmatpush1.bf16.msra.mxu0 %v1541
        %1581 = vmatprep.subr.bf16.mxu0 0
        %1582 = vmatpush1.bf16.msra.mxu0 %v1542
        %1583 = vmatprep.subr.bf16.mxu0 0
        %1584 = vmatpush1.bf16.msra.mxu0 %v1543
        %1585 = vmatprep.subr.bf16.mxu0 0
        %1586 = vmatpush1.bf16.msra.mxu0 %v1544
        %1587 = vmatprep.subr.bf16.mxu0 0
        %1588 = vmatpush1.bf16.msra.mxu0 %v1545
        %1589 = vmatprep.subr.bf16.mxu0 0
        %1590 = vmatpush1.bf16.msra.mxu0 %v1546
        %1591 = vmatprep.subr.bf16.mxu0 0
        %1592 = vmatpush1.bf16.msra.mxu0 %v1547
        %1593 = vmatprep.subr.bf16.mxu0 0
        %1594 = vmatpush1.bf16.msra.mxu0 %v1548
        %1595 = vmatprep.subr.bf16.mxu0 0
        %1596 = vmatpush1.bf16.msra.mxu0 %v1549
        %1597 = vmatprep.subr.bf16.mxu0 0
        %1598 = vmatpush1.bf16.msra.mxu0 %v1550
        %1599 = vmatprep.mubr.bf16.mxu0 %v1468
        %1600 = vmatmul.mubr.bf16.gmra.mrb[0].mxu0 %v1467
        %v1601 = vpop.f32.mrb[0].mxu0
        %v1602 = vadd.f32 0.0, %v1601
        %v1603 = vpop.f32.mrb[0].mxu0
        %v1604 = vpop.f32.mrb[0].mxu0
        %v1605 = vpop.f32.mrb[0].mxu0
        %1606 = vdwg.mxu0
        %v1607 = vadd.f32 %v1405, %v1602
        %s1608 = scalar_lea.vmem %s3, 768
        %v1609 = vld [vmem:[%s1608] sm:$0xf]
        %v1610 = vld [vmem:[%s1608 + $0x4] sm:$0xf]
        %v1611 = vld [vmem:[%s1608 + $0x8] sm:$0xf]
        %v1612 = vld [vmem:[%s1608 + $0xc] sm:$0xf]
        %v1613 = vld [vmem:[%s1608 + $0x10] sm:$0xf]
        %v1614 = vld [vmem:[%s1608 + $0x14] sm:$0xf]
        %v1615 = vld [vmem:[%s1608 + $0x18] sm:$0xf]
        %v1616 = vld [vmem:[%s1608 + $0x1c] sm:$0xf]
        %v1617 = vld [vmem:[%s1608 + $0x20] sm:$0xf]
        %v1618 = vld [vmem:[%s1608 + $0x24] sm:$0xf]
        %v1619 = vld [vmem:[%s1608 + $0x28] sm:$0xf]
        %v1620 = vld [vmem:[%s1608 + $0x2c] sm:$0xf]
        %v1621 = vld [vmem:[%s1608 + $0x30] sm:$0xf]
        %v1622 = vld [vmem:[%s1608 + $0x34] sm:$0xf]
        %v1623 = vld [vmem:[%s1608 + $0x38] sm:$0xf]
        %v1624 = vld [vmem:[%s1608 + $0x3c] sm:$0xf]
        %v1625 = vld [vmem:[%s1608 + $0x40] sm:$0xf]
        %v1626 = vld [vmem:[%s1608 + $0x44] sm:$0xf]
        %v1627 = vld [vmem:[%s1608 + $0x48] sm:$0xf]
        %v1628 = vld [vmem:[%s1608 + $0x4c] sm:$0xf]
        %v1629 = vld [vmem:[%s1608 + $0x50] sm:$0xf]
        %v1630 = vld [vmem:[%s1608 + $0x54] sm:$0xf]
        %v1631 = vld [vmem:[%s1608 + $0x58] sm:$0xf]
        %v1632 = vld [vmem:[%s1608 + $0x5c] sm:$0xf]
        %v1633 = vld [vmem:[%s1608 + $0x60] sm:$0xf]
        %v1634 = vld [vmem:[%s1608 + $0x64] sm:$0xf]
        %v1635 = vld [vmem:[%s1608 + $0x68] sm:$0xf]
        %v1636 = vld [vmem:[%s1608 + $0x6c] sm:$0xf]
        %v1637 = vld [vmem:[%s1608 + $0x70] sm:$0xf]
        %v1638 = vld [vmem:[%s1608 + $0x74] sm:$0xf]
        %v1639 = vld [vmem:[%s1608 + $0x78] sm:$0xf]
        %v1640 = vld [vmem:[%s1608 + $0x7c] sm:$0xf]
        %v1641 = vrot.slane %v441, 6
        %v1642 = vrot.slane %v443, 5
        %v1643 = vsel %vm458, %v1642, %v1641
        %v1644 = vrot.slane %v445, 4
        %v1645 = vsel %vm461, %v1644, %v1643
        %v1646 = vrot.slane %v447, 3
        %v1647 = vsel %vm464, %v1646, %v1645
        %v1648 = vrot.slane %v449, 2
        %v1649 = vsel %vm467, %v1648, %v1647
        %v1650 = vrot.slane %v451, 1
        %v1651 = vsel %vm470, %v1650, %v1649
        %v1652 = vsel %vm473, %v453, %v1651
        %v1653 = vrot.slane %v455, 7
        %v1654 = vsel %vm476, %v1653, %v1652
        %v1655 = vrot.slane %v442, 6
        %v1656 = vrot.slane %v444, 5
        %v1657 = vsel %vm458, %v1656, %v1655
        %v1658 = vrot.slane %v446, 4
        %v1659 = vsel %vm461, %v1658, %v1657
        %v1660 = vrot.slane %v448, 3
        %v1661 = vsel %vm464, %v1660, %v1659
        %v1662 = vrot.slane %v450, 2
        %v1663 = vsel %vm467, %v1662, %v1661
        %v1664 = vrot.slane %v452, 1
        %v1665 = vsel %vm470, %v1664, %v1663
        %v1666 = vsel %vm473, %v454, %v1665
        %v1667 = vrot.slane %v456, 7
        %v1668 = vsel %vm476, %v1667, %v1666
        %v1669 = vpack.c.b16 %v1654, %v1654
        %v1670 = vpack.c.b16 %v1668, %v1668
        %v1705 = vunpack.c.l.b16 %v1609
        %v1706 = vunpack.c.l.b16 %v1610
        %v1707 = vunpack.c.l.b16 %v1611
        %v1708 = vunpack.c.l.b16 %v1612
        %v1709 = vunpack.c.l.b16 %v1613
        %v1710 = vunpack.c.l.b16 %v1614
        %v1711 = vunpack.c.l.b16 %v1615
        %v1712 = vunpack.c.l.b16 %v1616
        %v1713 = vunpack.c.l.b16 %v1617
        %v1714 = vunpack.c.l.b16 %v1618
        %v1715 = vunpack.c.l.b16 %v1619
        %v1716 = vunpack.c.l.b16 %v1620
        %v1717 = vunpack.c.l.b16 %v1621
        %v1718 = vunpack.c.l.b16 %v1622
        %v1719 = vunpack.c.l.b16 %v1623
        %v1720 = vunpack.c.l.b16 %v1624
        %v1721 = vunpack.c.l.b16 %v1625
        %v1722 = vunpack.c.l.b16 %v1626
        %v1723 = vunpack.c.l.b16 %v1627
        %v1724 = vunpack.c.l.b16 %v1628
        %v1725 = vunpack.c.l.b16 %v1629
        %v1726 = vunpack.c.l.b16 %v1630
        %v1727 = vunpack.c.l.b16 %v1631
        %v1728 = vunpack.c.l.b16 %v1632
        %v1729 = vunpack.c.l.b16 %v1633
        %v1730 = vunpack.c.l.b16 %v1634
        %v1731 = vunpack.c.l.b16 %v1635
        %v1732 = vunpack.c.l.b16 %v1636
        %v1733 = vunpack.c.l.b16 %v1637
        %v1734 = vunpack.c.l.b16 %v1638
        %v1735 = vunpack.c.l.b16 %v1639
        %v1736 = vunpack.c.l.b16 %v1640
        %v1737 = vpack.c.b16 %v1706, %v1705
        %v1738 = vpack.c.b16 %v1708, %v1707
        %v1739 = vpack.c.b16 %v1710, %v1709
        %v1740 = vpack.c.b16 %v1712, %v1711
        %v1741 = vpack.c.b16 %v1714, %v1713
        %v1742 = vpack.c.b16 %v1716, %v1715
        %v1743 = vpack.c.b16 %v1718, %v1717
        %v1744 = vpack.c.b16 %v1720, %v1719
        %v1745 = vpack.c.b16 %v1722, %v1721
        %v1746 = vpack.c.b16 %v1724, %v1723
        %v1747 = vpack.c.b16 %v1726, %v1725
        %v1748 = vpack.c.b16 %v1728, %v1727
        %v1749 = vpack.c.b16 %v1730, %v1729
        %v1750 = vpack.c.b16 %v1732, %v1731
        %v1751 = vpack.c.b16 %v1734, %v1733
        %v1752 = vpack.c.b16 %v1736, %v1735
        %1769 = vmatprep.subr.bf16.mxu0 0
        %1770 = vmatpush1.bf16.msra.mxu0 %v1737
        %1771 = vmatprep.subr.bf16.mxu0 0
        %1772 = vmatpush1.bf16.msra.mxu0 %v1738
        %1773 = vmatprep.subr.bf16.mxu0 0
        %1774 = vmatpush1.bf16.msra.mxu0 %v1739
        %1775 = vmatprep.subr.bf16.mxu0 0
        %1776 = vmatpush1.bf16.msra.mxu0 %v1740
        %1777 = vmatprep.subr.bf16.mxu0 0
        %1778 = vmatpush1.bf16.msra.mxu0 %v1741
        %1779 = vmatprep.subr.bf16.mxu0 0
        %1780 = vmatpush1.bf16.msra.mxu0 %v1742
        %1781 = vmatprep.subr.bf16.mxu0 0
        %1782 = vmatpush1.bf16.msra.mxu0 %v1743
        %1783 = vmatprep.subr.bf16.mxu0 0
        %1784 = vmatpush1.bf16.msra.mxu0 %v1744
        %1785 = vmatprep.subr.bf16.mxu0 0
        %1786 = vmatpush1.bf16.msra.mxu0 %v1745
        %1787 = vmatprep.subr.bf16.mxu0 0
        %1788 = vmatpush1.bf16.msra.mxu0 %v1746
        %1789 = vmatprep.subr.bf16.mxu0 0
        %1790 = vmatpush1.bf16.msra.mxu0 %v1747
        %1791 = vmatprep.subr.bf16.mxu0 0
        %1792 = vmatpush1.bf16.msra.mxu0 %v1748
        %1793 = vmatprep.subr.bf16.mxu0 0
        %1794 = vmatpush1.bf16.msra.mxu0 %v1749
        %1795 = vmatprep.subr.bf16.mxu0 0
        %1796 = vmatpush1.bf16.msra.mxu0 %v1750
        %1797 = vmatprep.subr.bf16.mxu0 0
        %1798 = vmatpush1.bf16.msra.mxu0 %v1751
        %1799 = vmatprep.subr.bf16.mxu0 0
        %1800 = vmatpush1.bf16.msra.mxu0 %v1752
        %1801 = vmatprep.mubr.bf16.mxu0 %v1670
        %1802 = vmatmul.mubr.bf16.gmra.mrb[0].mxu0 %v1669
        %v1803 = vpop.f32.mrb[0].mxu0
        %v1804 = vadd.f32 0.0, %v1803
        %v1805 = vpop.f32.mrb[0].mxu0
        %v1806 = vpop.f32.mrb[0].mxu0
        %v1807 = vpop.f32.mrb[0].mxu0
        %1808 = vdwg.mxu0
        %v1809 = vadd.f32 %v1607, %v1804
        %s1810 = scalar_lea.vmem %s3, 896
        %v1811 = vld [vmem:[%s1810] sm:$0xf]
        %v1812 = vld [vmem:[%s1810 + $0x4] sm:$0xf]
        %v1813 = vld [vmem:[%s1810 + $0x8] sm:$0xf]
        %v1814 = vld [vmem:[%s1810 + $0xc] sm:$0xf]
        %v1815 = vld [vmem:[%s1810 + $0x10] sm:$0xf]
        %v1816 = vld [vmem:[%s1810 + $0x14] sm:$0xf]
        %v1817 = vld [vmem:[%s1810 + $0x18] sm:$0xf]
        %v1818 = vld [vmem:[%s1810 + $0x1c] sm:$0xf]
        %v1819 = vld [vmem:[%s1810 + $0x20] sm:$0xf]
        %v1820 = vld [vmem:[%s1810 + $0x24] sm:$0xf]
        %v1821 = vld [vmem:[%s1810 + $0x28] sm:$0xf]
        %v1822 = vld [vmem:[%s1810 + $0x2c] sm:$0xf]
        %v1823 = vld [vmem:[%s1810 + $0x30] sm:$0xf]
        %v1824 = vld [vmem:[%s1810 + $0x34] sm:$0xf]
        %v1825 = vld [vmem:[%s1810 + $0x38] sm:$0xf]
        %v1826 = vld [vmem:[%s1810 + $0x3c] sm:$0xf]
        %v1827 = vld [vmem:[%s1810 + $0x40] sm:$0xf]
        %v1828 = vld [vmem:[%s1810 + $0x44] sm:$0xf]
        %v1829 = vld [vmem:[%s1810 + $0x48] sm:$0xf]
        %v1830 = vld [vmem:[%s1810 + $0x4c] sm:$0xf]
        %v1831 = vld [vmem:[%s1810 + $0x50] sm:$0xf]
        %v1832 = vld [vmem:[%s1810 + $0x54] sm:$0xf]
        %v1833 = vld [vmem:[%s1810 + $0x58] sm:$0xf]
        %v1834 = vld [vmem:[%s1810 + $0x5c] sm:$0xf]
        %v1835 = vld [vmem:[%s1810 + $0x60] sm:$0xf]
        %v1836 = vld [vmem:[%s1810 + $0x64] sm:$0xf]
        %v1837 = vld [vmem:[%s1810 + $0x68] sm:$0xf]
        %v1838 = vld [vmem:[%s1810 + $0x6c] sm:$0xf]
        %v1839 = vld [vmem:[%s1810 + $0x70] sm:$0xf]
        %v1840 = vld [vmem:[%s1810 + $0x74] sm:$0xf]
        %v1841 = vld [vmem:[%s1810 + $0x78] sm:$0xf]
        %v1842 = vld [vmem:[%s1810 + $0x7c] sm:$0xf]
        %v1843 = vrot.slane %v441, 7
        %v1844 = vrot.slane %v443, 6
        %v1845 = vsel %vm458, %v1844, %v1843
        %v1846 = vrot.slane %v445, 5
        %v1847 = vsel %vm461, %v1846, %v1845
        %v1848 = vrot.slane %v447, 4
        %v1849 = vsel %vm464, %v1848, %v1847
        %v1850 = vrot.slane %v449, 3
        %v1851 = vsel %vm467, %v1850, %v1849
        %v1852 = vrot.slane %v451, 2
        %v1853 = vsel %vm470, %v1852, %v1851
        %v1854 = vrot.slane %v453, 1
        %v1855 = vsel %vm473, %v1854, %v1853
        %v1856 = vsel %vm476, %v455, %v1855
        %v1857 = vrot.slane %v442, 7
        %v1858 = vrot.slane %v444, 6
        %v1859 = vsel %vm458, %v1858, %v1857
        %v1860 = vrot.slane %v446, 5
        %v1861 = vsel %vm461, %v1860, %v1859
        %v1862 = vrot.slane %v448, 4
        %v1863 = vsel %vm464, %v1862, %v1861
        %v1864 = vrot.slane %v450, 3
        %v1865 = vsel %vm467, %v1864, %v1863
        %v1866 = vrot.slane %v452, 2
        %v1867 = vsel %vm470, %v1866, %v1865
        %v1868 = vrot.slane %v454, 1
        %v1869 = vsel %vm473, %v1868, %v1867
        %v1870 = vsel %vm476, %v456, %v1869
        %v1871 = vpack.c.b16 %v1856, %v1856
        %v1872 = vpack.c.b16 %v1870, %v1870
        %v1907 = vunpack.c.l.b16 %v1811
        %v1908 = vunpack.c.l.b16 %v1812
        %v1909 = vunpack.c.l.b16 %v1813
        %v1910 = vunpack.c.l.b16 %v1814
        %v1911 = vunpack.c.l.b16 %v1815
        %v1912 = vunpack.c.l.b16 %v1816
        %v1913 = vunpack.c.l.b16 %v1817
        %v1914 = vunpack.c.l.b16 %v1818
        %v1915 = vunpack.c.l.b16 %v1819
        %v1916 = vunpack.c.l.b16 %v1820
        %v1917 = vunpack.c.l.b16 %v1821
        %v1918 = vunpack.c.l.b16 %v1822
        %v1919 = vunpack.c.l.b16 %v1823
        %v1920 = vunpack.c.l.b16 %v1824
        %v1921 = vunpack.c.l.b16 %v1825
        %v1922 = vunpack.c.l.b16 %v1826
        %v1923 = vunpack.c.l.b16 %v1827
        %v1924 = vunpack.c.l.b16 %v1828
        %v1925 = vunpack.c.l.b16 %v1829
        %v1926 = vunpack.c.l.b16 %v1830
        %v1927 = vunpack.c.l.b16 %v1831
        %v1928 = vunpack.c.l.b16 %v1832
        %v1929 = vunpack.c.l.b16 %v1833
        %v1930 = vunpack.c.l.b16 %v1834
        %v1931 = vunpack.c.l.b16 %v1835
        %v1932 = vunpack.c.l.b16 %v1836
        %v1933 = vunpack.c.l.b16 %v1837
        %v1934 = vunpack.c.l.b16 %v1838
        %v1935 = vunpack.c.l.b16 %v1839
        %v1936 = vunpack.c.l.b16 %v1840
        %v1937 = vunpack.c.l.b16 %v1841
        %v1938 = vunpack.c.l.b16 %v1842
        %v1939 = vpack.c.b16 %v1908, %v1907
        %v1940 = vpack.c.b16 %v1910, %v1909
        %v1941 = vpack.c.b16 %v1912, %v1911
        %v1942 = vpack.c.b16 %v1914, %v1913
        %v1943 = vpack.c.b16 %v1916, %v1915
        %v1944 = vpack.c.b16 %v1918, %v1917
        %v1945 = vpack.c.b16 %v1920, %v1919
        %v1946 = vpack.c.b16 %v1922, %v1921
        %v1947 = vpack.c.b16 %v1924, %v1923
        %v1948 = vpack.c.b16 %v1926, %v1925
        %v1949 = vpack.c.b16 %v1928, %v1927
        %v1950 = vpack.c.b16 %v1930, %v1929
        %v1951 = vpack.c.b16 %v1932, %v1931
        %v1952 = vpack.c.b16 %v1934, %v1933
        %v1953 = vpack.c.b16 %v1936, %v1935
        %v1954 = vpack.c.b16 %v1938, %v1937
        %1971 = vmatprep.subr.bf16.mxu0 0
        %1972 = vmatpush1.bf16.msra.mxu0 %v1939
        %1973 = vmatprep.subr.bf16.mxu0 0
        %1974 = vmatpush1.bf16.msra.mxu0 %v1940
        %1975 = vmatprep.subr.bf16.mxu0 0
        %1976 = vmatpush1.bf16.msra.mxu0 %v1941
        %1977 = vmatprep.subr.bf16.mxu0 0
        %1978 = vmatpush1.bf16.msra.mxu0 %v1942
        %1979 = vmatprep.subr.bf16.mxu0 0
        %1980 = vmatpush1.bf16.msra.mxu0 %v1943
        %1981 = vmatprep.subr.bf16.mxu0 0
        %1982 = vmatpush1.bf16.msra.mxu0 %v1944
        %1983 = vmatprep.subr.bf16.mxu0 0
        %1984 = vmatpush1.bf16.msra.mxu0 %v1945
        %1985 = vmatprep.subr.bf16.mxu0 0
        %1986 = vmatpush1.bf16.msra.mxu0 %v1946
        %1987 = vmatprep.subr.bf16.mxu0 0
        %1988 = vmatpush1.bf16.msra.mxu0 %v1947
        %1989 = vmatprep.subr.bf16.mxu0 0
        %1990 = vmatpush1.bf16.msra.mxu0 %v1948
        %1991 = vmatprep.subr.bf16.mxu0 0
        %1992 = vmatpush1.bf16.msra.mxu0 %v1949
        %1993 = vmatprep.subr.bf16.mxu0 0
        %1994 = vmatpush1.bf16.msra.mxu0 %v1950
        %1995 = vmatprep.subr.bf16.mxu0 0
        %1996 = vmatpush1.bf16.msra.mxu0 %v1951
        %1997 = vmatprep.subr.bf16.mxu0 0
        %1998 = vmatpush1.bf16.msra.mxu0 %v1952
        %1999 = vmatprep.subr.bf16.mxu0 0
        %2000 = vmatpush1.bf16.msra.mxu0 %v1953
        %2001 = vmatprep.subr.bf16.mxu0 0
        %2002 = vmatpush1.bf16.msra.mxu0 %v1954
        %2003 = vmatprep.mubr.bf16.mxu0 %v1872
        %2004 = vmatmul.mubr.bf16.gmra.mrb[0].mxu0 %v1871
        %v2005 = vpop.f32.mrb[0].mxu0
        %v2006 = vadd.f32 0.0, %v2005
        %v2007 = vpop.f32.mrb[0].mxu0
        %v2008 = vpop.f32.mrb[0].mxu0
        %v2009 = vpop.f32.mrb[0].mxu0
        %2010 = vdwg.mxu0
        %v2011 = vadd.f32 %v1809, %v2006
        %v2012 = vld [vmem:[%s4] sm:$0x1]
        %v2014 = vlaneseq
        %v2015 = vshrl.u32 %v2014, 7
        %v2016 = vsub.s32 0, %v2015
        %v2017 = vrot.slane %v2012, %v2016
        %v2019 = vadd.f32 %v2011, %v2017
        %2020 = vst [vmem:[%s220] sm:$0xff] %v2019
        %s2021 = sand.u32 %s137, 1
        %s2022 = scalar_lea.sflag [#allocation4], %s2021
        %s2023 = sand.u32 %s137, 1
        %s2024 = smul.addr %s2023, 8
        %s2025 = scalar_lea.vmem [#allocation3], %s2024
        // Predicated region
        $region48: #{graft_layer_forward.1} parent=39 // pred_check
          %p2026 = pneg %p147
        $region49: #{graft_layer_forward.1} parent=39 // pred_check_branch
          %2028 = sbr.rel (%p2026) target = $region51
        $region50: #{graft_layer_forward.1} parent=39 // pred_region
          %s2030 = ssub.s32 128, 128
          %2031 = vsyncadd %s2022, %s2030
          %s2032 = smul.addr %s19, 128
          %s2033 = scalar_lea.hbm %s5, %s2032
          %s2035 = sshll.u32 %s2025, 4
          %s2036 = int_to_ptr.vmem [resolvable:$true] %s2035
          %2038 = dma.vmem_to_hbm [thread:$0]  %s2036, 128, %s2033, %s2022
        $region51: #{graft_layer_forward.1} parent=39 // pred_fallthru
          _
      $region40: #{graft_layer_forward.1} parent=5 // pred_fallthru
        _
      %p2039 = scmp.le.s32.totalorder 2, %s14
      // Predicated region
      $region52: #{graft_layer_forward.1} parent=5 // pred_check
        %p2040 = pneg %p2039
      $region53: #{graft_layer_forward.1} parent=5 // pred_check_branch
        %2042 = sbr.rel (%p2040) target = $region55
      $region54: #{graft_layer_forward.1} parent=5 // pred_region
        %s2043 = ssub.s32 %s14, 2
        // Predicated region
        $region56: #{graft_layer_forward.1} parent=54 // pred_check
          %p2044 = pneg %p153
        $region57: #{graft_layer_forward.1} parent=54 // pred_check_branch
          %2046 = sbr.rel (%p2044) target = $region59
        $region58: #{graft_layer_forward.1} parent=54 // pred_region
          %s2047 = sand.u32 %s138, 1
          %s2048 = scalar_lea.sflag [#allocation4], %s2047
          %s2049 = sand.u32 %s138, 1
          %s2050 = smul.addr %s2049, 8
          %s2051 = scalar_lea.vmem [#allocation3], %s2050
          %2052 = dma.done %s2048, 128
        $region59: #{graft_layer_forward.1} parent=54 // pred_fallthru
          _
      $region55: #{graft_layer_forward.1} parent=5 // pred_fallthru
        _
    $region6: #{graft_layer_forward.1} parent=1 // loop_footer
      %s18 = sadd.s32 1, %s14
    $region7: #{graft_layer_forward.1} parent=1 // loop_footer_branch
      %13 = sbr.rel target = $region3
    $region8: #{graft_layer_forward.1} parent=1 // loop_exit
      _
    %2053 = vsyncpa [#allocation4], 1
    %s2054 = scalar_lea.sflag [#allocation4], 1
    %2055 = vsyncpa %s2054, 1

</llo_original>
